<compile_context>
chip_gen: v6e
topology: v6e:2x2x1
jax: 0.10.0
libtpu: 0.0.40
codegen_flags: <defaults>
</compile_context>

<pallas_src>
import jax
import jax.numpy as jnp
from jax import lax
from jax.experimental import pallas as pl
from jax.experimental.pallas import tpu as pltpu

_LANES = 128


def _kernel_plain(scale_ref, x_ref, msg_ref, o_ref):
    """Unpacked path (width >= 128 or non-packable): per-row lane reduction."""
    x = x_ref[...].astype(jnp.float32)
    m = msg_ref[...].astype(jnp.float32)
    scale = scale_ref[0]
    m_ssq = jnp.sum(m * m, axis=-1, keepdims=True)
    x_ssq = jnp.sum(x * x, axis=-1, keepdims=True)
    # factor = scale * ||x|| / max(||msg||, 1e-12); sqrt/rsqrt go to the EUP slot.
    factor = scale * jnp.sqrt(x_ssq) * lax.rsqrt(jnp.maximum(m_ssq, 1e-24))
    o_ref[...] = (m * factor).astype(o_ref.dtype)


def _kernel_packed(scale_ref, sum_ref, bcast_ref, x_ref, msg_ref, o_ref):
    """Lane-dense packed path: k original rows folded into one 128-wide lane row."""
    x = x_ref[...].astype(jnp.float32)        # (TN, width)
    m = msg_ref[...].astype(jnp.float32)      # (TN, width)
    scale = scale_ref[0]
    sum_mat = sum_ref[...]                    # (width, k) 0/1, resident
    bcast_mat = bcast_ref[...]                # (k, width) 0/1, resident

    # Narrow segmented sums on the MXU.  Keep HIGHEST: f32 operands would otherwise be
    # truncated to bf16 before accumulation.
    m_ssq = jnp.dot(m * m, sum_mat, precision=lax.Precision.HIGHEST,
                    preferred_element_type=jnp.float32)            # (TN, k)
    x_ssq = jnp.dot(x * x, sum_mat, precision=lax.Precision.HIGHEST,
                    preferred_element_type=jnp.float32)            # (TN, k)

    # Per-original-row factor on the tiny (TN, k) tile — EUP work is 1/d of full width.
    f_narrow = scale * jnp.sqrt(x_ssq) * lax.rsqrt(jnp.maximum(m_ssq, 1e-24))

    # Broadcast each factor back across its d-wide lane segment with one 0/1 matmul.
    factor = jnp.dot(f_narrow, bcast_mat, precision=lax.Precision.HIGHEST,
                     preferred_element_type=jnp.float32)           # (TN, width)
    o_ref[...] = (m * factor).astype(o_ref.dtype)


def _vmem_limit_bytes():
    # 128 MiB physical on v5e/v6e -> allow 64 MiB scoped; 32 MiB is the safe ceiling on v7x.
    try:
        cap = int(pltpu.get_tpu_info().vmem_capacity_bytes)
        return 64 * 1024 * 1024 if cap >= 128 * 1024 * 1024 else 32 * 1024 * 1024
    except Exception:
        return 32 * 1024 * 1024


def _choose_tile_rows(rows, width, itemsize,
                      target_block_bytes=3 * 1024 * 1024,
                      min_block_bytes=1 * 1024 * 1024):
    """Pick a row tile targeting ~3 MiB per input block, with >=2 grid steps when cheap."""
    bpr = max(width * itemsize, 1)
    t = max(target_block_bytes // bpr, 32)

    # Prefer >= 4 (else >= 2) grid steps so v7x megacore shards the grid — but only while
    # blocks stay >= ~1 MiB so per-step overhead stays amortized.
    min_rows = max(min_block_bytes // bpr, 32)
    quarter = -(-rows // 4)
    half = -(-rows // 2)
    if quarter >= min_rows:
        t = min(t, quarter)
    elif half >= min_rows:
        t = min(t, half)

    t = max((t // 32) * 32, 8)                # sublane-pack friendly
    return rows if rows <= t else t


def msg_norm(x, msg, msg_scale, *, tile_rows=None, interpret=False):
    """MsgNorm forward. x, msg: [N, D]; msg_scale: [1] (learnable scalar)."""
    N, D = x.shape
    assert msg.shape == (N, D), "x and msg must have the same shape"
    out_dtype = msg.dtype

    # Lane-dense packing: fold k consecutive rows into one 128-wide lane row when D < 128.
    k = 1
    if D < _LANES and _LANES % D == 0:
        k = _LANES // D

    # Pad N up to a multiple of k (zero rows contribute factor 0 and are sliced off).
    pad = (-N) % k
    if pad:
        x = jnp.pad(x, ((0, pad), (0, 0)))
        msg = jnp.pad(msg, ((0, pad), (0, 0)))
    Np = N + pad
    rows, width = Np // k, k * D

    xp = x.reshape(rows, width)
    mp = msg.reshape(rows, width)

    itemsize = max(jnp.dtype(x.dtype).itemsize, jnp.dtype(msg.dtype).itemsize)
    if tile_rows is None:
        tile_rows = _choose_tile_rows(rows, width, itemsize)
    else:
        tile_rows = min(int(tile_rows), rows)
        if tile_rows < rows:                       # (8,128) tiling rule on partial tiles
            tile_rows = min(max((tile_rows // 8) * 8, 8), rows)

    grid = (pl.cdiv(rows, tile_rows),)

    scale = jnp.asarray(msg_scale, dtype=jnp.float32).reshape((1,))

    in_specs = [pl.BlockSpec(memory_space=pltpu.MemorySpace.SMEM)]   # msg_scale (1,)
    args = [scale]
    if k > 1:
        # 0/1 segment matrices, built once in the wrapper (nothing re-done per grid step).
        lane_seg = jnp.arange(width, dtype=jnp.int32) // D
        sum_mat = (lane_seg[:, None] ==
                   jnp.arange(k, dtype=jnp.int32)[None, :]).astype(jnp.float32)   # (width, k)
        bcast_mat = sum_mat.T                                                     # (k, width)
        in_specs += [
            pl.BlockSpec((width, k), lambda i: (0, 0)),   # resident across the grid
            pl.BlockSpec((k, width), lambda i: (0, 0)),
        ]
        args += [sum_mat, bcast_mat]
        kernel = _kernel_packed
    else:
        kernel = _kernel_plain

    in_specs += [
        pl.BlockSpec((tile_rows, width), lambda i: (i, 0)),  # x (packed view)
        pl.BlockSpec((tile_rows, width), lambda i: (i, 0)),  # msg (packed view)
    ]
    args += [xp, mp]

    out_itemsize = jnp.dtype(out_dtype).itemsize
    mm_flops = 6 * rows * width * k if k > 1 else 0          # two narrow sums + broadcast
    cost = pl.CostEstimate(
        flops=int(6 * rows * width + mm_flops),
        transcendentals=int(2 * rows * k),                   # sqrt + rsqrt per original row
        bytes_accessed=int(2 * rows * width * itemsize + rows * width * out_itemsize),
    )

    out = pl.pallas_call(
        kernel,
        out_shape=jax.ShapeDtypeStruct((rows, width), out_dtype),
        grid=grid,
        in_specs=in_specs,
        out_specs=pl.BlockSpec((tile_rows, width), lambda i: (i, 0)),
        compiler_params=pltpu.CompilerParams(
            dimension_semantics=("parallel",),        # megacore-shardable on v7x
            vmem_limit_bytes=_vmem_limit_bytes(),
        ),
        cost_estimate=cost,
        interpret=interpret,
    )(*args)

    out = out.reshape(Np, D)
    if pad:
        out = out[:N]
    return out


def _reference(x, msg, msg_scale):
    # Pure-JAX reference mirroring the PyTorch forward.
    x32 = x.astype(jnp.float32)
    m32 = msg.astype(jnp.float32)
    m_n = jnp.maximum(jnp.sqrt(jnp.sum(m32 * m32, axis=1, keepdims=True)), 1e-12)
    x_n = jnp.sqrt(jnp.sum(x32 * x32, axis=1, keepdims=True))
    return (m32 / m_n) * x_n * msg_scale[0]


if __name__ == "__main__":
    key = jax.random.PRNGKey(0)
    k1, k2, k3, k4 = jax.random.split(key, 4)

    # Parameter init per module __init__: msg_scale = [1.0] (learn_msg_scale=False).
    msg_scale = jnp.array([1.0], dtype=jnp.float32)

    # Case 1: small graph, D < 128, N divisible by k -> lane-dense packed path (k = 4).
    N, D = 16, 32
    x = jax.random.normal(k1, (N, D), dtype=jnp.float32)
    msg = jax.random.normal(k2, (N, D), dtype=jnp.float32)
    out = jax.block_until_ready(msg_norm(x, msg, msg_scale))
    ref = _reference(x, msg, msg_scale)
    assert out.shape == (N, D)
    assert jnp.allclose(out, ref, atol=1e-4, rtol=1e-4), "mismatch (packed path)"

    # Case 2: D multiple of 128 -> plain per-row reduction path.
    N2, D2 = 24, 128
    x2 = jax.random.normal(k3, (N2, D2), dtype=jnp.float32)
    msg2 = jax.random.normal(k4, (N2, D2), dtype=jnp.float32)
    out2 = jax.block_until_ready(msg_norm(x2, msg2, msg_scale))
    ref2 = _reference(x2, msg2, msg_scale)
    assert jnp.allclose(out2, ref2, atol=1e-4, rtol=1e-4), "mismatch (plain path)"

    # Case 3: ragged N (N % k != 0) -> zero-padded packed path, output sliced back.
    N3, D3 = 17, 32
    x3 = jax.random.normal(k1, (N3, D3), dtype=jnp.float32)
    msg3 = jax.random.normal(k2, (N3, D3), dtype=jnp.float32)
    out3 = jax.block_until_ready(msg_norm(x3, msg3, msg_scale))
    ref3 = _reference(x3, msg3, msg_scale)
    assert out3.shape == (N3, D3)
    assert jnp.allclose(out3, ref3, atol=1e-4, rtol=1e-4), "mismatch (padded path)"

    print("KERNEL_OK")
</pallas_src>

<mosaic_0001>
module attributes {stable_mosaic.version = 11 : i64} {
  func.func @_kernel_packed(%arg0: i32, %arg1: memref<1xf32, #tpu.memory_space<smem>>, %arg2: memref<128x4xf32, #tpu.memory_space<vmem>>, %arg3: memref<4x128xf32, #tpu.memory_space<vmem>>, %arg4: memref<4x128xf32, #tpu.memory_space<vmem>>, %arg5: memref<4x128xf32, #tpu.memory_space<vmem>>, %arg6: memref<4x128xf32, #tpu.memory_space<vmem>>) attributes {dimension_semantics = [#tpu.dimension_semantics<parallel>], iteration_bounds = array<i64: 1>, scalar_prefetch = 0 : i64, scratch_operands = 0 : i64, tpu.core_type = #tpu.core_type<tc>, window_params = [{transform_indices = @transform_0, window_bounds = array<i64: 1>}, {pipeline_mode = #tpu.pipeline_mode<synchronous>, transform_indices = @transform_1, window_bounds = array<i64: 128, 4>}, {pipeline_mode = #tpu.pipeline_mode<synchronous>, transform_indices = @transform_2, window_bounds = array<i64: 4, 128>}, {transform_indices = @transform_3, window_bounds = array<i64: 4, 128>}, {transform_indices = @transform_4, window_bounds = array<i64: 4, 128>}, {transform_indices = @transform_5, window_bounds = array<i64: 4, 128>}]} {
    %c0 = arith.constant 0 : index
    %c0_0 = arith.constant 0 : index
    %0 = vector.load %arg4[%c0, %c0_0] : memref<4x128xf32, #tpu.memory_space<vmem>>, vector<4x128xf32>
    %c0_1 = arith.constant 0 : index
    %c0_2 = arith.constant 0 : index
    %1 = vector.load %arg5[%c0_1, %c0_2] : memref<4x128xf32, #tpu.memory_space<vmem>>, vector<4x128xf32>
    %c0_3 = arith.constant 0 : index
    %2 = memref.load %arg1[%c0_3] : memref<1xf32, #tpu.memory_space<smem>>
    %c0_4 = arith.constant 0 : index
    %c0_5 = arith.constant 0 : index
    %3 = vector.load %arg2[%c0_4, %c0_5] : memref<128x4xf32, #tpu.memory_space<vmem>>, vector<128x4xf32>
    %c0_6 = arith.constant 0 : index
    %c0_7 = arith.constant 0 : index
    %4 = vector.load %arg3[%c0_6, %c0_7] : memref<4x128xf32, #tpu.memory_space<vmem>>, vector<4x128xf32>
    %5 = arith.mulf %1, %1 : vector<4x128xf32>
    %cst = arith.constant dense<0.000000e+00> : vector<4x4xf32>
    %6 = tpu.matmul %5, %3, %cst {dimension_numbers = #tpu.dot_dimension_numbers<[1], [0], [0], [1], [0, 0, 1, 1], [], []>, precision = #tpu.contract_precision<fp32>} : vector<4x128xf32>, vector<128x4xf32>, vector<4x4xf32> -> vector<4x4xf32>
    %7 = arith.mulf %0, %0 : vector<4x128xf32>
    %cst_8 = arith.constant dense<0.000000e+00> : vector<4x4xf32>
    %8 = tpu.matmul %7, %3, %cst_8 {dimension_numbers = #tpu.dot_dimension_numbers<[1], [0], [0], [1], [0, 0, 1, 1], [], []>, precision = #tpu.contract_precision<fp32>} : vector<4x128xf32>, vector<128x4xf32>, vector<4x4xf32> -> vector<4x4xf32>
    %9 = math.sqrt %8 : vector<4x4xf32>
    %10 = vector.broadcast %2 : f32 to vector<4x4xf32>
    %11 = arith.mulf %10, %9 : vector<4x4xf32>
    %cst_9 = arith.constant 1.000000e-24 : f32
    %12 = vector.broadcast %cst_9 : f32 to vector<4x4xf32>
    %13 = arith.maximumf %6, %12 : vector<4x4xf32>
    %14 = math.rsqrt %13 : vector<4x4xf32>
    %15 = arith.mulf %11, %14 : vector<4x4xf32>
    %cst_10 = arith.constant dense<0.000000e+00> : vector<4x128xf32>
    %16 = tpu.matmul %15, %4, %cst_10 {dimension_numbers = #tpu.dot_dimension_numbers<[1], [0], [0], [1], [0, 0, 1, 1], [], []>, precision = #tpu.contract_precision<fp32>} : vector<4x4xf32>, vector<4x128xf32>, vector<4x128xf32> -> vector<4x128xf32>
    %17 = arith.mulf %1, %16 : vector<4x128xf32>
    %c0_11 = arith.constant 0 : index
    %c0_12 = arith.constant 0 : index
    %18 = vector.load %arg6[%c0_11, %c0_12] : memref<4x128xf32, #tpu.memory_space<vmem>>, vector<4x128xf32>
    tpu.vector_store %arg6[%c0_11, %c0_12], %17 {strides = array<i32>} : memref<4x128xf32, #tpu.memory_space<vmem>>, vector<4x128xf32>,
    return
  }
  func.func @transform_0(%arg0: i32) -> i32 {
    %c0_i32 = arith.constant 0 : i32
    %c0_i32_0 = arith.constant 0 : i32
    return %c0_i32 : i32
  }
  func.func @transform_1(%arg0: i32) -> (i32, i32) {
    %c0_i32 = arith.constant 0 : i32
    %c0_i32_0 = arith.constant 0 : i32
    %c0_i32_1 = arith.constant 0 : i32
    return %c0_i32, %c0_i32_0 : i32, i32
  }
  func.func @transform_2(%arg0: i32) -> (i32, i32) {
    %c0_i32 = arith.constant 0 : i32
    %c0_i32_0 = arith.constant 0 : i32
    %c0_i32_1 = arith.constant 0 : i32
    return %c0_i32, %c0_i32_0 : i32, i32
  }
  func.func @transform_3(%arg0: i32) -> (i32, i32) {
    %c0_i32 = arith.constant 0 : i32
    %c0_i32_0 = arith.constant 0 : i32
    return %arg0, %c0_i32 : i32, i32
  }
  func.func @transform_4(%arg0: i32) -> (i32, i32) {
    %c0_i32 = arith.constant 0 : i32
    %c0_i32_0 = arith.constant 0 : i32
    return %arg0, %c0_i32 : i32, i32
  }
  func.func @transform_5(%arg0: i32) -> (i32, i32) {
    %c0_i32 = arith.constant 0 : i32
    %c0_i32_0 = arith.constant 0 : i32
    return %arg0, %c0_i32 : i32, i32
  }
}

</mosaic_0001>

<llo_original>
// kernel: tpu_custom_call.1
$region0: #{tpu_custom_call.1}
  #allocation0 [shape = 'u32[]', space=smem, size = 0x4, offset = 0x4, fixed_abs, tag = 'smem constant byte address 0x4 - core index']
  #allocation1 [shape = 'u32[144,128]{1,0:T(1,128)}', space=vmem, size = 0x12000, scoped, tag = 'internal scratch']
  #allocation2 [shape = 'f32[1]{0:T(128)S(6)}', space=smem, size = 0x200, scoped, tag = 'scoped memory for tpu_custom_call.1']
  %s0 = inlined_call_operand.<no memory space> [shape: f32[1], index: 0, kind: input, shape index: {}]
  %s1 = inlined_call_operand.vmem [shape: f32[128,4], index: 1, kind: input, shape index: {}]
  %s2 = inlined_call_operand.vmem [shape: f32[4,128], index: 2, kind: input, shape index: {}]
  %s3 = inlined_call_operand.vmem [shape: f32[4,128], index: 3, kind: input, shape index: {}]
  %s4 = inlined_call_operand.vmem [shape: f32[4,128], index: 4, kind: input, shape index: {}]
  %s5 = inlined_call_operand.hbm [shape: f32[4,128], index: 5, kind: output, shape index: {}]
  %s6 = sld [smem:[#allocation0]]
  $region30: #{tpu_custom_call.1} parent=0
    _
  %s8 = ssub.s32 1, %s6
  %s9 = scalar_select 0, %s8, %s6
  %10 = sst [smem:[#allocation2]] %s0
  $region1: #{tpu_custom_call.1} parent=0
    #allocation3 [shape = 'u8[2048]{0}', space=vmem, size = 0x800, scoped, tag = 'output window, operand 0, single buffered']
    #allocation4 [shape = 's32[1]{0}', space=sflag, size = 0x4, scoped, tag = 'scoped memory for tpu_custom_call.1']
    %11 = vsyncpa [#allocation4], 0
    // Predicated region
    $region2: #{tpu_custom_call.1} parent=1 // pred_check
      _
    $region3: #{tpu_custom_call.1} parent=1 // pred_check_branch
      %13 = sbr.rel (0) target = $region5
    $region4: #{tpu_custom_call.1} parent=1 // pred_region
      _
    $region5: #{tpu_custom_call.1} parent=1 // pred_fallthru
      _
    // Predicated region
    $region6: #{tpu_custom_call.1} parent=1 // pred_check
      _
    $region7: #{tpu_custom_call.1} parent=1 // pred_check_branch
      %15 = sbr.rel (0) target = $region9
    $region8: #{tpu_custom_call.1} parent=1 // pred_region
      _
    $region9: #{tpu_custom_call.1} parent=1 // pred_fallthru
      _
    // Predicated region
    $region10: #{tpu_custom_call.1} parent=1 // pred_check
      _
    $region11: #{tpu_custom_call.1} parent=1 // pred_check_branch
      %17 = sbr.rel (0) target = $region13
    $region12: #{tpu_custom_call.1} parent=1 // pred_region
      _
    $region13: #{tpu_custom_call.1} parent=1 // pred_fallthru
      _
    // Predicated region
    $region14: #{tpu_custom_call.1} parent=1 // pred_check
      _
    $region15: #{tpu_custom_call.1} parent=1 // pred_check_branch
      %19 = sbr.rel (0) target = $region17
    $region16: #{tpu_custom_call.1} parent=1 // pred_region
      _
    $region17: #{tpu_custom_call.1} parent=1 // pred_fallthru
      _
    // Predicated region
    $region18: #{tpu_custom_call.1} parent=1 // pred_check
      _
    $region19: #{tpu_custom_call.1} parent=1 // pred_check_branch
      %21 = sbr.rel (0) target = $region21
    $region20: #{tpu_custom_call.1} parent=1 // pred_region
      _
    $region21: #{tpu_custom_call.1} parent=1 // pred_fallthru
      _
    %v22 = vld [vmem:[%s3] sm:$0xf]
    %v23 = vld [vmem:[%s4] sm:$0xf]
    %s24 = sld [smem:[#allocation2]]
    %v25 = vld [vmem:[%s1] sm:$0xff]
    %v26 = vld [vmem:[%s1 + $0x8] sm:$0xff]
    %v27 = vld [vmem:[%s1 + $0x10] sm:$0xff]
    %v28 = vld [vmem:[%s1 + $0x18] sm:$0xff]
    %v29 = vld [vmem:[%s1 + $0x20] sm:$0xff]
    %v30 = vld [vmem:[%s1 + $0x28] sm:$0xff]
    %v31 = vld [vmem:[%s1 + $0x30] sm:$0xff]
    %v32 = vld [vmem:[%s1 + $0x38] sm:$0xff]
    %v33 = vld [vmem:[%s1 + $0x40] sm:$0xff]
    %v34 = vld [vmem:[%s1 + $0x48] sm:$0xff]
    %v35 = vld [vmem:[%s1 + $0x50] sm:$0xff]
    %v36 = vld [vmem:[%s1 + $0x58] sm:$0xff]
    %v37 = vld [vmem:[%s1 + $0x60] sm:$0xff]
    %v38 = vld [vmem:[%s1 + $0x68] sm:$0xff]
    %v39 = vld [vmem:[%s1 + $0x70] sm:$0xff]
    %v40 = vld [vmem:[%s1 + $0x78] sm:$0xff]
    %v41 = vld [vmem:[%s2] sm:$0xf]
    %v42 = vmul.f32 %v23, %v23
    %43 = vmatprep.subr.mxu0 0.0
    %v44 = vand.u32 %v40, 4294901760
    %45 = vmatpush1.msra.mxu0 %v44
    %46 = vmatprep.subr.mxu0 0.0
    %v47 = vand.u32 %v39, 4294901760
    %48 = vmatpush1.msra.mxu0 %v47
    %49 = vmatprep.subr.mxu0 0.0
    %v50 = vand.u32 %v38, 4294901760
    %51 = vmatpush1.msra.mxu0 %v50
    %52 = vmatprep.subr.mxu0 0.0
    %v53 = vand.u32 %v37, 4294901760
    %54 = vmatpush1.msra.mxu0 %v53
    %55 = vmatprep.subr.mxu0 0.0
    %v56 = vand.u32 %v36, 4294901760
    %57 = vmatpush1.msra.mxu0 %v56
    %58 = vmatprep.subr.mxu0 0.0
    %v59 = vand.u32 %v35, 4294901760
    %60 = vmatpush1.msra.mxu0 %v59
    %61 = vmatprep.subr.mxu0 0.0
    %v62 = vand.u32 %v34, 4294901760
    %63 = vmatpush1.msra.mxu0 %v62
    %64 = vmatprep.subr.mxu0 0.0
    %v65 = vand.u32 %v33, 4294901760
    %66 = vmatpush1.msra.mxu0 %v65
    %67 = vmatprep.subr.mxu0 0.0
    %v68 = vand.u32 %v32, 4294901760
    %69 = vmatpush1.msra.mxu0 %v68
    %70 = vmatprep.subr.mxu0 0.0
    %v71 = vand.u32 %v31, 4294901760
    %72 = vmatpush1.msra.mxu0 %v71
    %73 = vmatprep.subr.mxu0 0.0
    %v74 = vand.u32 %v30, 4294901760
    %75 = vmatpush1.msra.mxu0 %v74
    %76 = vmatprep.subr.mxu0 0.0
    %v77 = vand.u32 %v29, 4294901760
    %78 = vmatpush1.msra.mxu0 %v77
    %79 = vmatprep.subr.mxu0 0.0
    %v80 = vand.u32 %v28, 4294901760
    %81 = vmatpush1.msra.mxu0 %v80
    %82 = vmatprep.subr.mxu0 0.0
    %v83 = vand.u32 %v27, 4294901760
    %84 = vmatpush1.msra.mxu0 %v83
    %85 = vmatprep.subr.mxu0 0.0
    %v86 = vand.u32 %v26, 4294901760
    %87 = vmatpush1.msra.mxu0 %v86
    %88 = vmatprep.subr.mxu0 0.0
    %v89 = vand.u32 %v25, 4294901760
    %90 = vmatpush1.msra.mxu0 %v89
    %91 = vmatprep.subr.mxu0 0.0
    %92 = vmatpush2.msra.mxu0 0.0
    %93 = vmatprep.subr.mxu0 0.0
    %94 = vmatpush2.msra.mxu0 0.0
    %95 = vmatprep.subr.mxu0 0.0
    %96 = vmatpush2.msra.mxu0 0.0
    %97 = vmatprep.subr.mxu0 0.0
    %98 = vmatpush2.msra.mxu0 0.0
    %99 = vmatprep.subr.mxu0 0.0
    %100 = vmatpush2.msra.mxu0 0.0
    %101 = vmatprep.subr.mxu0 0.0
    %102 = vmatpush2.msra.mxu0 0.0
    %103 = vmatprep.subr.mxu0 0.0
    %104 = vmatpush2.msra.mxu0 0.0
    %105 = vmatprep.subr.mxu0 0.0
    %106 = vmatpush2.msra.mxu0 0.0
    %107 = vmatprep.subr.mxu0 0.0
    %108 = vmatpush2.msra.mxu0 0.0
    %109 = vmatprep.subr.mxu0 0.0
    %110 = vmatpush2.msra.mxu0 0.0
    %111 = vmatprep.subr.mxu0 0.0
    %112 = vmatpush2.msra.mxu0 0.0
    %113 = vmatprep.subr.mxu0 0.0
    %114 = vmatpush2.msra.mxu0 0.0
    %115 = vmatprep.subr.mxu0 0.0
    %116 = vmatpush2.msra.mxu0 0.0
    %117 = vmatprep.subr.mxu0 0.0
    %118 = vmatpush2.msra.mxu0 0.0
    %119 = vmatprep.subr.mxu0 0.0
    %120 = vmatpush2.msra.mxu0 0.0
    %121 = vmatprep.subr.mxu0 0.0
    %122 = vmatpush2.msra.mxu0 0.0
    %123 = vmatprep.mubr.f32.mxu0 0.0
    %v124 = vand.u32 %v42, 4294901760
    %v125 = vsub.f32 %v42, %v124
    %v126 = vand.u32 %v125, 4294901760
    %v127 = vsub.f32 %v125, %v126
    %v128 = vand.u32 %v127, 4294901760
    %129 = vmatmul.mubr.f32.gmra.mxu0 %v128
    %v130 = vpop.f32.mrf.mxu0
    %v131 = vadd.f32 0.0, %v130
    %v132 = vpop.f32.mrf.mxu0
    %133 = vdwg.mxu0
    %134 = vmatprep.subr.mxu0 0.0
    %v135 = vand.u32 %v40, 4294901760
    %v136 = vsub.f32 %v40, %v135
    %v137 = vand.u32 %v136, 4294901760
    %v138 = vsub.f32 %v136, %v137
    %v139 = vand.u32 %v138, 4294901760
    %140 = vmatpush1.msra.mxu0 %v139
    %141 = vmatprep.subr.mxu0 0.0
    %v142 = vand.u32 %v39, 4294901760
    %v143 = vsub.f32 %v39, %v142
    %v144 = vand.u32 %v143, 4294901760
    %v145 = vsub.f32 %v143, %v144
    %v146 = vand.u32 %v145, 4294901760
    %147 = vmatpush1.msra.mxu0 %v146
    %148 = vmatprep.subr.mxu0 0.0
    %v149 = vand.u32 %v38, 4294901760
    %v150 = vsub.f32 %v38, %v149
    %v151 = vand.u32 %v150, 4294901760
    %v152 = vsub.f32 %v150, %v151
    %v153 = vand.u32 %v152, 4294901760
    %154 = vmatpush1.msra.mxu0 %v153
    %155 = vmatprep.subr.mxu0 0.0
    %v156 = vand.u32 %v37, 4294901760
    %v157 = vsub.f32 %v37, %v156
    %v158 = vand.u32 %v157, 4294901760
    %v159 = vsub.f32 %v157, %v158
    %v160 = vand.u32 %v159, 4294901760
    %161 = vmatpush1.msra.mxu0 %v160
    %162 = vmatprep.subr.mxu0 0.0
    %v163 = vand.u32 %v36, 4294901760
    %v164 = vsub.f32 %v36, %v163
    %v165 = vand.u32 %v164, 4294901760
    %v166 = vsub.f32 %v164, %v165
    %v167 = vand.u32 %v166, 4294901760
    %168 = vmatpush1.msra.mxu0 %v167
    %169 = vmatprep.subr.mxu0 0.0
    %v170 = vand.u32 %v35, 4294901760
    %v171 = vsub.f32 %v35, %v170
    %v172 = vand.u32 %v171, 4294901760
    %v173 = vsub.f32 %v171, %v172
    %v174 = vand.u32 %v173, 4294901760
    %175 = vmatpush1.msra.mxu0 %v174
    %176 = vmatprep.subr.mxu0 0.0
    %v177 = vand.u32 %v34, 4294901760
    %v178 = vsub.f32 %v34, %v177
    %v179 = vand.u32 %v178, 4294901760
    %v180 = vsub.f32 %v178, %v179
    %v181 = vand.u32 %v180, 4294901760
    %182 = vmatpush1.msra.mxu0 %v181
    %183 = vmatprep.subr.mxu0 0.0
    %v184 = vand.u32 %v33, 4294901760
    %v185 = vsub.f32 %v33, %v184
    %v186 = vand.u32 %v185, 4294901760
    %v187 = vsub.f32 %v185, %v186
    %v188 = vand.u32 %v187, 4294901760
    %189 = vmatpush1.msra.mxu0 %v188
    %190 = vmatprep.subr.mxu0 0.0
    %v191 = vand.u32 %v32, 4294901760
    %v192 = vsub.f32 %v32, %v191
    %v193 = vand.u32 %v192, 4294901760
    %v194 = vsub.f32 %v192, %v193
    %v195 = vand.u32 %v194, 4294901760
    %196 = vmatpush1.msra.mxu0 %v195
    %197 = vmatprep.subr.mxu0 0.0
    %v198 = vand.u32 %v31, 4294901760
    %v199 = vsub.f32 %v31, %v198
    %v200 = vand.u32 %v199, 4294901760
    %v201 = vsub.f32 %v199, %v200
    %v202 = vand.u32 %v201, 4294901760
    %203 = vmatpush1.msra.mxu0 %v202
    %204 = vmatprep.subr.mxu0 0.0
    %v205 = vand.u32 %v30, 4294901760
    %v206 = vsub.f32 %v30, %v205
    %v207 = vand.u32 %v206, 4294901760
    %v208 = vsub.f32 %v206, %v207
    %v209 = vand.u32 %v208, 4294901760
    %210 = vmatpush1.msra.mxu0 %v209
    %211 = vmatprep.subr.mxu0 0.0
    %v212 = vand.u32 %v29, 4294901760
    %v213 = vsub.f32 %v29, %v212
    %v214 = vand.u32 %v213, 4294901760
    %v215 = vsub.f32 %v213, %v214
    %v216 = vand.u32 %v215, 4294901760
    %217 = vmatpush1.msra.mxu0 %v216
    %218 = vmatprep.subr.mxu0 0.0
    %v219 = vand.u32 %v28, 4294901760
    %v220 = vsub.f32 %v28, %v219
    %v221 = vand.u32 %v220, 4294901760
    %v222 = vsub.f32 %v220, %v221
    %v223 = vand.u32 %v222, 4294901760
    %224 = vmatpush1.msra.mxu0 %v223
    %225 = vmatprep.subr.mxu0 0.0
    %v226 = vand.u32 %v27, 4294901760
    %v227 = vsub.f32 %v27, %v226
    %v228 = vand.u32 %v227, 4294901760
    %v229 = vsub.f32 %v227, %v228
    %v230 = vand.u32 %v229, 4294901760
    %231 = vmatpush1.msra.mxu0 %v230
    %232 = vmatprep.subr.mxu0 0.0
    %v233 = vand.u32 %v26, 4294901760
    %v234 = vsub.f32 %v26, %v233
    %v235 = vand.u32 %v234, 4294901760
    %v236 = vsub.f32 %v234, %v235
    %v237 = vand.u32 %v236, 4294901760
    %238 = vmatpush1.msra.mxu0 %v237
    %239 = vmatprep.subr.mxu0 0.0
    %v240 = vand.u32 %v25, 4294901760
    %v241 = vsub.f32 %v25, %v240
    %v242 = vand.u32 %v241, 4294901760
    %v243 = vsub.f32 %v241, %v242
    %v244 = vand.u32 %v243, 4294901760
    %245 = vmatpush1.msra.mxu0 %v244
    %246 = vmatprep.subr.mxu0 0.0
    %247 = vmatpush2.msra.mxu0 0.0
    %248 = vmatprep.subr.mxu0 0.0
    %249 = vmatpush2.msra.mxu0 0.0
    %250 = vmatprep.subr.mxu0 0.0
    %251 = vmatpush2.msra.mxu0 0.0
    %252 = vmatprep.subr.mxu0 0.0
    %253 = vmatpush2.msra.mxu0 0.0
    %254 = vmatprep.subr.mxu0 0.0
    %255 = vmatpush2.msra.mxu0 0.0
    %256 = vmatprep.subr.mxu0 0.0
    %257 = vmatpush2.msra.mxu0 0.0
    %258 = vmatprep.subr.mxu0 0.0
    %259 = vmatpush2.msra.mxu0 0.0
    %260 = vmatprep.subr.mxu0 0.0
    %261 = vmatpush2.msra.mxu0 0.0
    %262 = vmatprep.subr.mxu0 0.0
    %263 = vmatpush2.msra.mxu0 0.0
    %264 = vmatprep.subr.mxu0 0.0
    %265 = vmatpush2.msra.mxu0 0.0
    %266 = vmatprep.subr.mxu0 0.0
    %267 = vmatpush2.msra.mxu0 0.0
    %268 = vmatprep.subr.mxu0 0.0
    %269 = vmatpush2.msra.mxu0 0.0
    %270 = vmatprep.subr.mxu0 0.0
    %271 = vmatpush2.msra.mxu0 0.0
    %272 = vmatprep.subr.mxu0 0.0
    %273 = vmatpush2.msra.mxu0 0.0
    %274 = vmatprep.subr.mxu0 0.0
    %275 = vmatpush2.msra.mxu0 0.0
    %276 = vmatprep.subr.mxu0 0.0
    %277 = vmatpush2.msra.mxu0 0.0
    %278 = vmatprep.mubr.f32.mxu0 0.0
    %v279 = vand.u32 %v42, 4294901760
    %280 = vmatmul.mubr.f32.gmra.mxu0 %v279
    %v281 = vpop.f32.mrf.mxu0
    %v282 = vadd.f32 %v131, %v281
    %v283 = vpop.f32.mrf.mxu0
    %284 = vdwg.mxu0
    %285 = vmatprep.subr.mxu0 0.0
    %v286 = vand.u32 %v40, 4294901760
    %v287 = vsub.f32 %v40, %v286
    %288 = vmatpush1.msra.mxu0 %v287
    %289 = vmatprep.subr.mxu0 0.0
    %v290 = vand.u32 %v39, 4294901760
    %v291 = vsub.f32 %v39, %v290
    %292 = vmatpush1.msra.mxu0 %v291
    %293 = vmatprep.subr.mxu0 0.0
    %v294 = vand.u32 %v38, 4294901760
    %v295 = vsub.f32 %v38, %v294
    %296 = vmatpush1.msra.mxu0 %v295
    %297 = vmatprep.subr.mxu0 0.0
    %v298 = vand.u32 %v37, 4294901760
    %v299 = vsub.f32 %v37, %v298
    %300 = vmatpush1.msra.mxu0 %v299
    %301 = vmatprep.subr.mxu0 0.0
    %v302 = vand.u32 %v36, 4294901760
    %v303 = vsub.f32 %v36, %v302
    %304 = vmatpush1.msra.mxu0 %v303
    %305 = vmatprep.subr.mxu0 0.0
    %v306 = vand.u32 %v35, 4294901760
    %v307 = vsub.f32 %v35, %v306
    %308 = vmatpush1.msra.mxu0 %v307
    %309 = vmatprep.subr.mxu0 0.0
    %v310 = vand.u32 %v34, 4294901760
    %v311 = vsub.f32 %v34, %v310
    %312 = vmatpush1.msra.mxu0 %v311
    %313 = vmatprep.subr.mxu0 0.0
    %v314 = vand.u32 %v33, 4294901760
    %v315 = vsub.f32 %v33, %v314
    %316 = vmatpush1.msra.mxu0 %v315
    %317 = vmatprep.subr.mxu0 0.0
    %v318 = vand.u32 %v32, 4294901760
    %v319 = vsub.f32 %v32, %v318
    %320 = vmatpush1.msra.mxu0 %v319
    %321 = vmatprep.subr.mxu0 0.0
    %v322 = vand.u32 %v31, 4294901760
    %v323 = vsub.f32 %v31, %v322
    %324 = vmatpush1.msra.mxu0 %v323
    %325 = vmatprep.subr.mxu0 0.0
    %v326 = vand.u32 %v30, 4294901760
    %v327 = vsub.f32 %v30, %v326
    %328 = vmatpush1.msra.mxu0 %v327
    %329 = vmatprep.subr.mxu0 0.0
    %v330 = vand.u32 %v29, 4294901760
    %v331 = vsub.f32 %v29, %v330
    %332 = vmatpush1.msra.mxu0 %v331
    %333 = vmatprep.subr.mxu0 0.0
    %v334 = vand.u32 %v28, 4294901760
    %v335 = vsub.f32 %v28, %v334
    %336 = vmatpush1.msra.mxu0 %v335
    %337 = vmatprep.subr.mxu0 0.0
    %v338 = vand.u32 %v27, 4294901760
    %v339 = vsub.f32 %v27, %v338
    %340 = vmatpush1.msra.mxu0 %v339
    %341 = vmatprep.subr.mxu0 0.0
    %v342 = vand.u32 %v26, 4294901760
    %v343 = vsub.f32 %v26, %v342
    %344 = vmatpush1.msra.mxu0 %v343
    %345 = vmatprep.subr.mxu0 0.0
    %v346 = vand.u32 %v25, 4294901760
    %v347 = vsub.f32 %v25, %v346
    %348 = vmatpush1.msra.mxu0 %v347
    %349 = vmatprep.subr.mxu0 0.0
    %350 = vmatpush2.msra.mxu0 0.0
    %351 = vmatprep.subr.mxu0 0.0
    %352 = vmatpush2.msra.mxu0 0.0
    %353 = vmatprep.subr.mxu0 0.0
    %354 = vmatpush2.msra.mxu0 0.0
    %355 = vmatprep.subr.mxu0 0.0
    %356 = vmatpush2.msra.mxu0 0.0
    %357 = vmatprep.subr.mxu0 0.0
    %358 = vmatpush2.msra.mxu0 0.0
    %359 = vmatprep.subr.mxu0 0.0
    %360 = vmatpush2.msra.mxu0 0.0
    %361 = vmatprep.subr.mxu0 0.0
    %362 = vmatpush2.msra.mxu0 0.0
    %363 = vmatprep.subr.mxu0 0.0
    %364 = vmatpush2.msra.mxu0 0.0
    %365 = vmatprep.subr.mxu0 0.0
    %366 = vmatpush2.msra.mxu0 0.0
    %367 = vmatprep.subr.mxu0 0.0
    %368 = vmatpush2.msra.mxu0 0.0
    %369 = vmatprep.subr.mxu0 0.0
    %370 = vmatpush2.msra.mxu0 0.0
    %371 = vmatprep.subr.mxu0 0.0
    %372 = vmatpush2.msra.mxu0 0.0
    %373 = vmatprep.subr.mxu0 0.0
    %374 = vmatpush2.msra.mxu0 0.0
    %375 = vmatprep.subr.mxu0 0.0
    %376 = vmatpush2.msra.mxu0 0.0
    %377 = vmatprep.subr.mxu0 0.0
    %378 = vmatpush2.msra.mxu0 0.0
    %379 = vmatprep.subr.mxu0 0.0
    %380 = vmatpush2.msra.mxu0 0.0
    %381 = vmatprep.mubr.f32.mxu0 0.0
    %v382 = vand.u32 %v42, 4294901760
    %v383 = vsub.f32 %v42, %v382
    %384 = vmatmul.mubr.f32.gmra.mxu0 %v383
    %v385 = vpop.f32.mrf.mxu0
    %v386 = vadd.f32 %v282, %v385
    %v387 = vpop.f32.mrf.mxu0
    %388 = vdwg.mxu0
    %389 = vmatprep.subr.mxu0 0.0
    %v390 = vand.u32 %v40, 4294901760
    %391 = vmatpush1.msra.mxu0 %v390
    %392 = vmatprep.subr.mxu0 0.0
    %v393 = vand.u32 %v39, 4294901760
    %394 = vmatpush1.msra.mxu0 %v393
    %395 = vmatprep.subr.mxu0 0.0
    %v396 = vand.u32 %v38, 4294901760
    %397 = vmatpush1.msra.mxu0 %v396
    %398 = vmatprep.subr.mxu0 0.0
    %v399 = vand.u32 %v37, 4294901760
    %400 = vmatpush1.msra.mxu0 %v399
    %401 = vmatprep.subr.mxu0 0.0
    %v402 = vand.u32 %v36, 4294901760
    %403 = vmatpush1.msra.mxu0 %v402
    %404 = vmatprep.subr.mxu0 0.0
    %v405 = vand.u32 %v35, 4294901760
    %406 = vmatpush1.msra.mxu0 %v405
    %407 = vmatprep.subr.mxu0 0.0
    %v408 = vand.u32 %v34, 4294901760
    %409 = vmatpush1.msra.mxu0 %v408
    %410 = vmatprep.subr.mxu0 0.0
    %v411 = vand.u32 %v33, 4294901760
    %412 = vmatpush1.msra.mxu0 %v411
    %413 = vmatprep.subr.mxu0 0.0
    %v414 = vand.u32 %v32, 4294901760
    %415 = vmatpush1.msra.mxu0 %v414
    %416 = vmatprep.subr.mxu0 0.0
    %v417 = vand.u32 %v31, 4294901760
    %418 = vmatpush1.msra.mxu0 %v417
    %419 = vmatprep.subr.mxu0 0.0
    %v420 = vand.u32 %v30, 4294901760
    %421 = vmatpush1.msra.mxu0 %v420
    %422 = vmatprep.subr.mxu0 0.0
    %v423 = vand.u32 %v29, 4294901760
    %424 = vmatpush1.msra.mxu0 %v423
    %425 = vmatprep.subr.mxu0 0.0
    %v426 = vand.u32 %v28, 4294901760
    %427 = vmatpush1.msra.mxu0 %v426
    %428 = vmatprep.subr.mxu0 0.0
    %v429 = vand.u32 %v27, 4294901760
    %430 = vmatpush1.msra.mxu0 %v429
    %431 = vmatprep.subr.mxu0 0.0
    %v432 = vand.u32 %v26, 4294901760
    %433 = vmatpush1.msra.mxu0 %v432
    %434 = vmatprep.subr.mxu0 0.0
    %v435 = vand.u32 %v25, 4294901760
    %436 = vmatpush1.msra.mxu0 %v435
    %437 = vmatprep.subr.mxu0 0.0
    %438 = vmatpush2.msra.mxu0 0.0
    %439 = vmatprep.subr.mxu0 0.0
    %440 = vmatpush2.msra.mxu0 0.0
    %441 = vmatprep.subr.mxu0 0.0
    %442 = vmatpush2.msra.mxu0 0.0
    %443 = vmatprep.subr.mxu0 0.0
    %444 = vmatpush2.msra.mxu0 0.0
    %445 = vmatprep.subr.mxu0 0.0
    %446 = vmatpush2.msra.mxu0 0.0
    %447 = vmatprep.subr.mxu0 0.0
    %448 = vmatpush2.msra.mxu0 0.0
    %449 = vmatprep.subr.mxu0 0.0
    %450 = vmatpush2.msra.mxu0 0.0
    %451 = vmatprep.subr.mxu0 0.0
    %452 = vmatpush2.msra.mxu0 0.0
    %453 = vmatprep.subr.mxu0 0.0
    %454 = vmatpush2.msra.mxu0 0.0
    %455 = vmatprep.subr.mxu0 0.0
    %456 = vmatpush2.msra.mxu0 0.0
    %457 = vmatprep.subr.mxu0 0.0
    %458 = vmatpush2.msra.mxu0 0.0
    %459 = vmatprep.subr.mxu0 0.0
    %460 = vmatpush2.msra.mxu0 0.0
    %461 = vmatprep.subr.mxu0 0.0
    %462 = vmatpush2.msra.mxu0 0.0
    %463 = vmatprep.subr.mxu0 0.0
    %464 = vmatpush2.msra.mxu0 0.0
    %465 = vmatprep.subr.mxu0 0.0
    %466 = vmatpush2.msra.mxu0 0.0
    %467 = vmatprep.subr.mxu0 0.0
    %468 = vmatpush2.msra.mxu0 0.0
    %469 = vmatprep.mubr.f32.mxu0 0.0
    %v470 = vand.u32 %v42, 4294901760
    %v471 = vsub.f32 %v42, %v470
    %v472 = vand.u32 %v471, 4294901760
    %473 = vmatmul.mubr.f32.gmra.mxu0 %v472
    %v474 = vpop.f32.mrf.mxu0
    %v475 = vadd.f32 %v386, %v474
    %v476 = vpop.f32.mrf.mxu0
    %477 = vdwg.mxu0
    %478 = vmatprep.subr.mxu0 0.0
    %v479 = vand.u32 %v40, 4294901760
    %v480 = vsub.f32 %v40, %v479
    %v481 = vand.u32 %v480, 4294901760
    %482 = vmatpush1.msra.mxu0 %v481
    %483 = vmatprep.subr.mxu0 0.0
    %v484 = vand.u32 %v39, 4294901760
    %v485 = vsub.f32 %v39, %v484
    %v486 = vand.u32 %v485, 4294901760
    %487 = vmatpush1.msra.mxu0 %v486
    %488 = vmatprep.subr.mxu0 0.0
    %v489 = vand.u32 %v38, 4294901760
    %v490 = vsub.f32 %v38, %v489
    %v491 = vand.u32 %v490, 4294901760
    %492 = vmatpush1.msra.mxu0 %v491
    %493 = vmatprep.subr.mxu0 0.0
    %v494 = vand.u32 %v37, 4294901760
    %v495 = vsub.f32 %v37, %v494
    %v496 = vand.u32 %v495, 4294901760
    %497 = vmatpush1.msra.mxu0 %v496
    %498 = vmatprep.subr.mxu0 0.0
    %v499 = vand.u32 %v36, 4294901760
    %v500 = vsub.f32 %v36, %v499
    %v501 = vand.u32 %v500, 4294901760
    %502 = vmatpush1.msra.mxu0 %v501
    %503 = vmatprep.subr.mxu0 0.0
    %v504 = vand.u32 %v35, 4294901760
    %v505 = vsub.f32 %v35, %v504
    %v506 = vand.u32 %v505, 4294901760
    %507 = vmatpush1.msra.mxu0 %v506
    %508 = vmatprep.subr.mxu0 0.0
    %v509 = vand.u32 %v34, 4294901760
    %v510 = vsub.f32 %v34, %v509
    %v511 = vand.u32 %v510, 4294901760
    %512 = vmatpush1.msra.mxu0 %v511
    %513 = vmatprep.subr.mxu0 0.0
    %v514 = vand.u32 %v33, 4294901760
    %v515 = vsub.f32 %v33, %v514
    %v516 = vand.u32 %v515, 4294901760
    %517 = vmatpush1.msra.mxu0 %v516
    %518 = vmatprep.subr.mxu0 0.0
    %v519 = vand.u32 %v32, 4294901760
    %v520 = vsub.f32 %v32, %v519
    %v521 = vand.u32 %v520, 4294901760
    %522 = vmatpush1.msra.mxu0 %v521
    %523 = vmatprep.subr.mxu0 0.0
    %v524 = vand.u32 %v31, 4294901760
    %v525 = vsub.f32 %v31, %v524
    %v526 = vand.u32 %v525, 4294901760
    %527 = vmatpush1.msra.mxu0 %v526
    %528 = vmatprep.subr.mxu0 0.0
    %v529 = vand.u32 %v30, 4294901760
    %v530 = vsub.f32 %v30, %v529
    %v531 = vand.u32 %v530, 4294901760
    %532 = vmatpush1.msra.mxu0 %v531
    %533 = vmatprep.subr.mxu0 0.0
    %v534 = vand.u32 %v29, 4294901760
    %v535 = vsub.f32 %v29, %v534
    %v536 = vand.u32 %v535, 4294901760
    %537 = vmatpush1.msra.mxu0 %v536
    %538 = vmatprep.subr.mxu0 0.0
    %v539 = vand.u32 %v28, 4294901760
    %v540 = vsub.f32 %v28, %v539
    %v541 = vand.u32 %v540, 4294901760
    %542 = vmatpush1.msra.mxu0 %v541
    %543 = vmatprep.subr.mxu0 0.0
    %v544 = vand.u32 %v27, 4294901760
    %v545 = vsub.f32 %v27, %v544
    %v546 = vand.u32 %v545, 4294901760
    %547 = vmatpush1.msra.mxu0 %v546
    %548 = vmatprep.subr.mxu0 0.0
    %v549 = vand.u32 %v26, 4294901760
    %v550 = vsub.f32 %v26, %v549
    %v551 = vand.u32 %v550, 4294901760
    %552 = vmatpush1.msra.mxu0 %v551
    %553 = vmatprep.subr.mxu0 0.0
    %v554 = vand.u32 %v25, 4294901760
    %v555 = vsub.f32 %v25, %v554
    %v556 = vand.u32 %v555, 4294901760
    %557 = vmatpush1.msra.mxu0 %v556
    %558 = vmatprep.subr.mxu0 0.0
    %559 = vmatpush2.msra.mxu0 0.0
    %560 = vmatprep.subr.mxu0 0.0
    %561 = vmatpush2.msra.mxu0 0.0
    %562 = vmatprep.subr.mxu0 0.0
    %563 = vmatpush2.msra.mxu0 0.0
    %564 = vmatprep.subr.mxu0 0.0
    %565 = vmatpush2.msra.mxu0 0.0
    %566 = vmatprep.subr.mxu0 0.0
    %567 = vmatpush2.msra.mxu0 0.0
    %568 = vmatprep.subr.mxu0 0.0
    %569 = vmatpush2.msra.mxu0 0.0
    %570 = vmatprep.subr.mxu0 0.0
    %571 = vmatpush2.msra.mxu0 0.0
    %572 = vmatprep.subr.mxu0 0.0
    %573 = vmatpush2.msra.mxu0 0.0
    %574 = vmatprep.subr.mxu0 0.0
    %575 = vmatpush2.msra.mxu0 0.0
    %576 = vmatprep.subr.mxu0 0.0
    %577 = vmatpush2.msra.mxu0 0.0
    %578 = vmatprep.subr.mxu0 0.0
    %579 = vmatpush2.msra.mxu0 0.0
    %580 = vmatprep.subr.mxu0 0.0
    %581 = vmatpush2.msra.mxu0 0.0
    %582 = vmatprep.subr.mxu0 0.0
    %583 = vmatpush2.msra.mxu0 0.0
    %584 = vmatprep.subr.mxu0 0.0
    %585 = vmatpush2.msra.mxu0 0.0
    %586 = vmatprep.subr.mxu0 0.0
    %587 = vmatpush2.msra.mxu0 0.0
    %588 = vmatprep.subr.mxu0 0.0
    %589 = vmatpush2.msra.mxu0 0.0
    %590 = vmatprep.mubr.f32.mxu0 0.0
    %v591 = vand.u32 %v42, 4294901760
    %592 = vmatmul.mubr.f32.gmra.mxu0 %v591
    %v593 = vpop.f32.mrf.mxu0
    %v594 = vadd.f32 %v475, %v593
    %v595 = vpop.f32.mrf.mxu0
    %596 = vdwg.mxu0
    %597 = vmatprep.subr.mxu0 0.0
    %v598 = vand.u32 %v40, 4294901760
    %599 = vmatpush1.msra.mxu0 %v598
    %600 = vmatprep.subr.mxu0 0.0
    %v601 = vand.u32 %v39, 4294901760
    %602 = vmatpush1.msra.mxu0 %v601
    %603 = vmatprep.subr.mxu0 0.0
    %v604 = vand.u32 %v38, 4294901760
    %605 = vmatpush1.msra.mxu0 %v604
    %606 = vmatprep.subr.mxu0 0.0
    %v607 = vand.u32 %v37, 4294901760
    %608 = vmatpush1.msra.mxu0 %v607
    %609 = vmatprep.subr.mxu0 0.0
    %v610 = vand.u32 %v36, 4294901760
    %611 = vmatpush1.msra.mxu0 %v610
    %612 = vmatprep.subr.mxu0 0.0
    %v613 = vand.u32 %v35, 4294901760
    %614 = vmatpush1.msra.mxu0 %v613
    %615 = vmatprep.subr.mxu0 0.0
    %v616 = vand.u32 %v34, 4294901760
    %617 = vmatpush1.msra.mxu0 %v616
    %618 = vmatprep.subr.mxu0 0.0
    %v619 = vand.u32 %v33, 4294901760
    %620 = vmatpush1.msra.mxu0 %v619
    %621 = vmatprep.subr.mxu0 0.0
    %v622 = vand.u32 %v32, 4294901760
    %623 = vmatpush1.msra.mxu0 %v622
    %624 = vmatprep.subr.mxu0 0.0
    %v625 = vand.u32 %v31, 4294901760
    %626 = vmatpush1.msra.mxu0 %v625
    %627 = vmatprep.subr.mxu0 0.0
    %v628 = vand.u32 %v30, 4294901760
    %629 = vmatpush1.msra.mxu0 %v628
    %630 = vmatprep.subr.mxu0 0.0
    %v631 = vand.u32 %v29, 4294901760
    %632 = vmatpush1.msra.mxu0 %v631
    %633 = vmatprep.subr.mxu0 0.0
    %v634 = vand.u32 %v28, 4294901760
    %635 = vmatpush1.msra.mxu0 %v634
    %636 = vmatprep.subr.mxu0 0.0
    %v637 = vand.u32 %v27, 4294901760
    %638 = vmatpush1.msra.mxu0 %v637
    %639 = vmatprep.subr.mxu0 0.0
    %v640 = vand.u32 %v26, 4294901760
    %641 = vmatpush1.msra.mxu0 %v640
    %642 = vmatprep.subr.mxu0 0.0
    %v643 = vand.u32 %v25, 4294901760
    %644 = vmatpush1.msra.mxu0 %v643
    %645 = vmatprep.subr.mxu0 0.0
    %646 = vmatpush2.msra.mxu0 0.0
    %647 = vmatprep.subr.mxu0 0.0
    %648 = vmatpush2.msra.mxu0 0.0
    %649 = vmatprep.subr.mxu0 0.0
    %650 = vmatpush2.msra.mxu0 0.0
    %651 = vmatprep.subr.mxu0 0.0
    %652 = vmatpush2.msra.mxu0 0.0
    %653 = vmatprep.subr.mxu0 0.0
    %654 = vmatpush2.msra.mxu0 0.0
    %655 = vmatprep.subr.mxu0 0.0
    %656 = vmatpush2.msra.mxu0 0.0
    %657 = vmatprep.subr.mxu0 0.0
    %658 = vmatpush2.msra.mxu0 0.0
    %659 = vmatprep.subr.mxu0 0.0
    %660 = vmatpush2.msra.mxu0 0.0
    %661 = vmatprep.subr.mxu0 0.0
    %662 = vmatpush2.msra.mxu0 0.0
    %663 = vmatprep.subr.mxu0 0.0
    %664 = vmatpush2.msra.mxu0 0.0
    %665 = vmatprep.subr.mxu0 0.0
    %666 = vmatpush2.msra.mxu0 0.0
    %667 = vmatprep.subr.mxu0 0.0
    %668 = vmatpush2.msra.mxu0 0.0
    %669 = vmatprep.subr.mxu0 0.0
    %670 = vmatpush2.msra.mxu0 0.0
    %671 = vmatprep.subr.mxu0 0.0
    %672 = vmatpush2.msra.mxu0 0.0
    %673 = vmatprep.subr.mxu0 0.0
    %674 = vmatpush2.msra.mxu0 0.0
    %675 = vmatprep.subr.mxu0 0.0
    %676 = vmatpush2.msra.mxu0 0.0
    %677 = vmatprep.mubr.f32.mxu0 0.0
    %v678 = vand.u32 %v42, 4294901760
    %679 = vmatmul.mubr.f32.gmra.mxu0 %v678
    %v680 = vpop.f32.mrf.mxu0
    %v681 = vadd.f32 %v594, %v680
    %v682 = vpop.f32.mrf.mxu0
    %683 = vdwg.mxu0
    %v684 = vmul.f32 %v22, %v22
    %685 = vmatprep.subr.mxu0 0.0
    %v686 = vand.u32 %v40, 4294901760
    %687 = vmatpush1.msra.mxu0 %v686
    %688 = vmatprep.subr.mxu0 0.0
    %v689 = vand.u32 %v39, 4294901760
    %690 = vmatpush1.msra.mxu0 %v689
    %691 = vmatprep.subr.mxu0 0.0
    %v692 = vand.u32 %v38, 4294901760
    %693 = vmatpush1.msra.mxu0 %v692
    %694 = vmatprep.subr.mxu0 0.0
    %v695 = vand.u32 %v37, 4294901760
    %696 = vmatpush1.msra.mxu0 %v695
    %697 = vmatprep.subr.mxu0 0.0
    %v698 = vand.u32 %v36, 4294901760
    %699 = vmatpush1.msra.mxu0 %v698
    %700 = vmatprep.subr.mxu0 0.0
    %v701 = vand.u32 %v35, 4294901760
    %702 = vmatpush1.msra.mxu0 %v701
    %703 = vmatprep.subr.mxu0 0.0
    %v704 = vand.u32 %v34, 4294901760
    %705 = vmatpush1.msra.mxu0 %v704
    %706 = vmatprep.subr.mxu0 0.0
    %v707 = vand.u32 %v33, 4294901760
    %708 = vmatpush1.msra.mxu0 %v707
    %709 = vmatprep.subr.mxu0 0.0
    %v710 = vand.u32 %v32, 4294901760
    %711 = vmatpush1.msra.mxu0 %v710
    %712 = vmatprep.subr.mxu0 0.0
    %v713 = vand.u32 %v31, 4294901760
    %714 = vmatpush1.msra.mxu0 %v713
    %715 = vmatprep.subr.mxu0 0.0
    %v716 = vand.u32 %v30, 4294901760
    %717 = vmatpush1.msra.mxu0 %v716
    %718 = vmatprep.subr.mxu0 0.0
    %v719 = vand.u32 %v29, 4294901760
    %720 = vmatpush1.msra.mxu0 %v719
    %721 = vmatprep.subr.mxu0 0.0
    %v722 = vand.u32 %v28, 4294901760
    %723 = vmatpush1.msra.mxu0 %v722
    %724 = vmatprep.subr.mxu0 0.0
    %v725 = vand.u32 %v27, 4294901760
    %726 = vmatpush1.msra.mxu0 %v725
    %727 = vmatprep.subr.mxu0 0.0
    %v728 = vand.u32 %v26, 4294901760
    %729 = vmatpush1.msra.mxu0 %v728
    %730 = vmatprep.subr.mxu0 0.0
    %v731 = vand.u32 %v25, 4294901760
    %732 = vmatpush1.msra.mxu0 %v731
    %733 = vmatprep.subr.mxu0 0.0
    %734 = vmatpush2.msra.mxu0 0.0
    %735 = vmatprep.subr.mxu0 0.0
    %736 = vmatpush2.msra.mxu0 0.0
    %737 = vmatprep.subr.mxu0 0.0
    %738 = vmatpush2.msra.mxu0 0.0
    %739 = vmatprep.subr.mxu0 0.0
    %740 = vmatpush2.msra.mxu0 0.0
    %741 = vmatprep.subr.mxu0 0.0
    %742 = vmatpush2.msra.mxu0 0.0
    %743 = vmatprep.subr.mxu0 0.0
    %744 = vmatpush2.msra.mxu0 0.0
    %745 = vmatprep.subr.mxu0 0.0
    %746 = vmatpush2.msra.mxu0 0.0
    %747 = vmatprep.subr.mxu0 0.0
    %748 = vmatpush2.msra.mxu0 0.0
    %749 = vmatprep.subr.mxu0 0.0
    %750 = vmatpush2.msra.mxu0 0.0
    %751 = vmatprep.subr.mxu0 0.0
    %752 = vmatpush2.msra.mxu0 0.0
    %753 = vmatprep.subr.mxu0 0.0
    %754 = vmatpush2.msra.mxu0 0.0
    %755 = vmatprep.subr.mxu0 0.0
    %756 = vmatpush2.msra.mxu0 0.0
    %757 = vmatprep.subr.mxu0 0.0
    %758 = vmatpush2.msra.mxu0 0.0
    %759 = vmatprep.subr.mxu0 0.0
    %760 = vmatpush2.msra.mxu0 0.0
    %761 = vmatprep.subr.mxu0 0.0
    %762 = vmatpush2.msra.mxu0 0.0
    %763 = vmatprep.subr.mxu0 0.0
    %764 = vmatpush2.msra.mxu0 0.0
    %765 = vmatprep.mubr.f32.mxu0 0.0
    %v766 = vand.u32 %v684, 4294901760
    %v767 = vsub.f32 %v684, %v766
    %v768 = vand.u32 %v767, 4294901760
    %v769 = vsub.f32 %v767, %v768
    %v770 = vand.u32 %v769, 4294901760
    %771 = vmatmul.mubr.f32.gmra.mxu0 %v770
    %v772 = vpop.f32.mrf.mxu0
    %v773 = vadd.f32 0.0, %v772
    %v774 = vpop.f32.mrf.mxu0
    %775 = vdwg.mxu0
    %776 = vmatprep.subr.mxu0 0.0
    %v777 = vand.u32 %v40, 4294901760
    %v778 = vsub.f32 %v40, %v777
    %v779 = vand.u32 %v778, 4294901760
    %v780 = vsub.f32 %v778, %v779
    %v781 = vand.u32 %v780, 4294901760
    %782 = vmatpush1.msra.mxu0 %v781
    %783 = vmatprep.subr.mxu0 0.0
    %v784 = vand.u32 %v39, 4294901760
    %v785 = vsub.f32 %v39, %v784
    %v786 = vand.u32 %v785, 4294901760
    %v787 = vsub.f32 %v785, %v786
    %v788 = vand.u32 %v787, 4294901760
    %789 = vmatpush1.msra.mxu0 %v788
    %790 = vmatprep.subr.mxu0 0.0
    %v791 = vand.u32 %v38, 4294901760
    %v792 = vsub.f32 %v38, %v791
    %v793 = vand.u32 %v792, 4294901760
    %v794 = vsub.f32 %v792, %v793
    %v795 = vand.u32 %v794, 4294901760
    %796 = vmatpush1.msra.mxu0 %v795
    %797 = vmatprep.subr.mxu0 0.0
    %v798 = vand.u32 %v37, 4294901760
    %v799 = vsub.f32 %v37, %v798
    %v800 = vand.u32 %v799, 4294901760
    %v801 = vsub.f32 %v799, %v800
    %v802 = vand.u32 %v801, 4294901760
    %803 = vmatpush1.msra.mxu0 %v802
    %804 = vmatprep.subr.mxu0 0.0
    %v805 = vand.u32 %v36, 4294901760
    %v806 = vsub.f32 %v36, %v805
    %v807 = vand.u32 %v806, 4294901760
    %v808 = vsub.f32 %v806, %v807
    %v809 = vand.u32 %v808, 4294901760
    %810 = vmatpush1.msra.mxu0 %v809
    %811 = vmatprep.subr.mxu0 0.0
    %v812 = vand.u32 %v35, 4294901760
    %v813 = vsub.f32 %v35, %v812
    %v814 = vand.u32 %v813, 4294901760
    %v815 = vsub.f32 %v813, %v814
    %v816 = vand.u32 %v815, 4294901760
    %817 = vmatpush1.msra.mxu0 %v816
    %818 = vmatprep.subr.mxu0 0.0
    %v819 = vand.u32 %v34, 4294901760
    %v820 = vsub.f32 %v34, %v819
    %v821 = vand.u32 %v820, 4294901760
    %v822 = vsub.f32 %v820, %v821
    %v823 = vand.u32 %v822, 4294901760
    %824 = vmatpush1.msra.mxu0 %v823
    %825 = vmatprep.subr.mxu0 0.0
    %v826 = vand.u32 %v33, 4294901760
    %v827 = vsub.f32 %v33, %v826
    %v828 = vand.u32 %v827, 4294901760
    %v829 = vsub.f32 %v827, %v828
    %v830 = vand.u32 %v829, 4294901760
    %831 = vmatpush1.msra.mxu0 %v830
    %832 = vmatprep.subr.mxu0 0.0
    %v833 = vand.u32 %v32, 4294901760
    %v834 = vsub.f32 %v32, %v833
    %v835 = vand.u32 %v834, 4294901760
    %v836 = vsub.f32 %v834, %v835
    %v837 = vand.u32 %v836, 4294901760
    %838 = vmatpush1.msra.mxu0 %v837
    %839 = vmatprep.subr.mxu0 0.0
    %v840 = vand.u32 %v31, 4294901760
    %v841 = vsub.f32 %v31, %v840
    %v842 = vand.u32 %v841, 4294901760
    %v843 = vsub.f32 %v841, %v842
    %v844 = vand.u32 %v843, 4294901760
    %845 = vmatpush1.msra.mxu0 %v844
    %846 = vmatprep.subr.mxu0 0.0
    %v847 = vand.u32 %v30, 4294901760
    %v848 = vsub.f32 %v30, %v847
    %v849 = vand.u32 %v848, 4294901760
    %v850 = vsub.f32 %v848, %v849
    %v851 = vand.u32 %v850, 4294901760
    %852 = vmatpush1.msra.mxu0 %v851
    %853 = vmatprep.subr.mxu0 0.0
    %v854 = vand.u32 %v29, 4294901760
    %v855 = vsub.f32 %v29, %v854
    %v856 = vand.u32 %v855, 4294901760
    %v857 = vsub.f32 %v855, %v856
    %v858 = vand.u32 %v857, 4294901760
    %859 = vmatpush1.msra.mxu0 %v858
    %860 = vmatprep.subr.mxu0 0.0
    %v861 = vand.u32 %v28, 4294901760
    %v862 = vsub.f32 %v28, %v861
    %v863 = vand.u32 %v862, 4294901760
    %v864 = vsub.f32 %v862, %v863
    %v865 = vand.u32 %v864, 4294901760
    %866 = vmatpush1.msra.mxu0 %v865
    %867 = vmatprep.subr.mxu0 0.0
    %v868 = vand.u32 %v27, 4294901760
    %v869 = vsub.f32 %v27, %v868
    %v870 = vand.u32 %v869, 4294901760
    %v871 = vsub.f32 %v869, %v870
    %v872 = vand.u32 %v871, 4294901760
    %873 = vmatpush1.msra.mxu0 %v872
    %874 = vmatprep.subr.mxu0 0.0
    %v875 = vand.u32 %v26, 4294901760
    %v876 = vsub.f32 %v26, %v875
    %v877 = vand.u32 %v876, 4294901760
    %v878 = vsub.f32 %v876, %v877
    %v879 = vand.u32 %v878, 4294901760
    %880 = vmatpush1.msra.mxu0 %v879
    %881 = vmatprep.subr.mxu0 0.0
    %v882 = vand.u32 %v25, 4294901760
    %v883 = vsub.f32 %v25, %v882
    %v884 = vand.u32 %v883, 4294901760
    %v885 = vsub.f32 %v883, %v884
    %v886 = vand.u32 %v885, 4294901760
    %887 = vmatpush1.msra.mxu0 %v886
    %888 = vmatprep.subr.mxu0 0.0
    %889 = vmatpush2.msra.mxu0 0.0
    %890 = vmatprep.subr.mxu0 0.0
    %891 = vmatpush2.msra.mxu0 0.0
    %892 = vmatprep.subr.mxu0 0.0
    %893 = vmatpush2.msra.mxu0 0.0
    %894 = vmatprep.subr.mxu0 0.0
    %895 = vmatpush2.msra.mxu0 0.0
    %896 = vmatprep.subr.mxu0 0.0
    %897 = vmatpush2.msra.mxu0 0.0
    %898 = vmatprep.subr.mxu0 0.0
    %899 = vmatpush2.msra.mxu0 0.0
    %900 = vmatprep.subr.mxu0 0.0
    %901 = vmatpush2.msra.mxu0 0.0
    %902 = vmatprep.subr.mxu0 0.0
    %903 = vmatpush2.msra.mxu0 0.0
    %904 = vmatprep.subr.mxu0 0.0
    %905 = vmatpush2.msra.mxu0 0.0
    %906 = vmatprep.subr.mxu0 0.0
    %907 = vmatpush2.msra.mxu0 0.0
    %908 = vmatprep.subr.mxu0 0.0
    %909 = vmatpush2.msra.mxu0 0.0
    %910 = vmatprep.subr.mxu0 0.0
    %911 = vmatpush2.msra.mxu0 0.0
    %912 = vmatprep.subr.mxu0 0.0
    %913 = vmatpush2.msra.mxu0 0.0
    %914 = vmatprep.subr.mxu0 0.0
    %915 = vmatpush2.msra.mxu0 0.0
    %916 = vmatprep.subr.mxu0 0.0
    %917 = vmatpush2.msra.mxu0 0.0
    %918 = vmatprep.subr.mxu0 0.0
    %919 = vmatpush2.msra.mxu0 0.0
    %920 = vmatprep.mubr.f32.mxu0 0.0
    %v921 = vand.u32 %v684, 4294901760
    %922 = vmatmul.mubr.f32.gmra.mxu0 %v921
    %v923 = vpop.f32.mrf.mxu0
    %v924 = vadd.f32 %v773, %v923
    %v925 = vpop.f32.mrf.mxu0
    %926 = vdwg.mxu0
    %927 = vmatprep.subr.mxu0 0.0
    %v928 = vand.u32 %v40, 4294901760
    %v929 = vsub.f32 %v40, %v928
    %930 = vmatpush1.msra.mxu0 %v929
    %931 = vmatprep.subr.mxu0 0.0
    %v932 = vand.u32 %v39, 4294901760
    %v933 = vsub.f32 %v39, %v932
    %934 = vmatpush1.msra.mxu0 %v933
    %935 = vmatprep.subr.mxu0 0.0
    %v936 = vand.u32 %v38, 4294901760
    %v937 = vsub.f32 %v38, %v936
    %938 = vmatpush1.msra.mxu0 %v937
    %939 = vmatprep.subr.mxu0 0.0
    %v940 = vand.u32 %v37, 4294901760
    %v941 = vsub.f32 %v37, %v940
    %942 = vmatpush1.msra.mxu0 %v941
    %943 = vmatprep.subr.mxu0 0.0
    %v944 = vand.u32 %v36, 4294901760
    %v945 = vsub.f32 %v36, %v944
    %946 = vmatpush1.msra.mxu0 %v945
    %947 = vmatprep.subr.mxu0 0.0
    %v948 = vand.u32 %v35, 4294901760
    %v949 = vsub.f32 %v35, %v948
    %950 = vmatpush1.msra.mxu0 %v949
    %951 = vmatprep.subr.mxu0 0.0
    %v952 = vand.u32 %v34, 4294901760
    %v953 = vsub.f32 %v34, %v952
    %954 = vmatpush1.msra.mxu0 %v953
    %955 = vmatprep.subr.mxu0 0.0
    %v956 = vand.u32 %v33, 4294901760
    %v957 = vsub.f32 %v33, %v956
    %958 = vmatpush1.msra.mxu0 %v957
    %959 = vmatprep.subr.mxu0 0.0
    %v960 = vand.u32 %v32, 4294901760
    %v961 = vsub.f32 %v32, %v960
    %962 = vmatpush1.msra.mxu0 %v961
    %963 = vmatprep.subr.mxu0 0.0
    %v964 = vand.u32 %v31, 4294901760
    %v965 = vsub.f32 %v31, %v964
    %966 = vmatpush1.msra.mxu0 %v965
    %967 = vmatprep.subr.mxu0 0.0
    %v968 = vand.u32 %v30, 4294901760
    %v969 = vsub.f32 %v30, %v968
    %970 = vmatpush1.msra.mxu0 %v969
    %971 = vmatprep.subr.mxu0 0.0
    %v972 = vand.u32 %v29, 4294901760
    %v973 = vsub.f32 %v29, %v972
    %974 = vmatpush1.msra.mxu0 %v973
    %975 = vmatprep.subr.mxu0 0.0
    %v976 = vand.u32 %v28, 4294901760
    %v977 = vsub.f32 %v28, %v976
    %978 = vmatpush1.msra.mxu0 %v977
    %979 = vmatprep.subr.mxu0 0.0
    %v980 = vand.u32 %v27, 4294901760
    %v981 = vsub.f32 %v27, %v980
    %982 = vmatpush1.msra.mxu0 %v981
    %983 = vmatprep.subr.mxu0 0.0
    %v984 = vand.u32 %v26, 4294901760
    %v985 = vsub.f32 %v26, %v984
    %986 = vmatpush1.msra.mxu0 %v985
    %987 = vmatprep.subr.mxu0 0.0
    %v988 = vand.u32 %v25, 4294901760
    %v989 = vsub.f32 %v25, %v988
    %990 = vmatpush1.msra.mxu0 %v989
    %991 = vmatprep.subr.mxu0 0.0
    %992 = vmatpush2.msra.mxu0 0.0
    %993 = vmatprep.subr.mxu0 0.0
    %994 = vmatpush2.msra.mxu0 0.0
    %995 = vmatprep.subr.mxu0 0.0
    %996 = vmatpush2.msra.mxu0 0.0
    %997 = vmatprep.subr.mxu0 0.0
    %998 = vmatpush2.msra.mxu0 0.0
    %999 = vmatprep.subr.mxu0 0.0
    %1000 = vmatpush2.msra.mxu0 0.0
    %1001 = vmatprep.subr.mxu0 0.0
    %1002 = vmatpush2.msra.mxu0 0.0
    %1003 = vmatprep.subr.mxu0 0.0
    %1004 = vmatpush2.msra.mxu0 0.0
    %1005 = vmatprep.subr.mxu0 0.0
    %1006 = vmatpush2.msra.mxu0 0.0
    %1007 = vmatprep.subr.mxu0 0.0
    %1008 = vmatpush2.msra.mxu0 0.0
    %1009 = vmatprep.subr.mxu0 0.0
    %1010 = vmatpush2.msra.mxu0 0.0
    %1011 = vmatprep.subr.mxu0 0.0
    %1012 = vmatpush2.msra.mxu0 0.0
    %1013 = vmatprep.subr.mxu0 0.0
    %1014 = vmatpush2.msra.mxu0 0.0
    %1015 = vmatprep.subr.mxu0 0.0
    %1016 = vmatpush2.msra.mxu0 0.0
    %1017 = vmatprep.subr.mxu0 0.0
    %1018 = vmatpush2.msra.mxu0 0.0
    %1019 = vmatprep.subr.mxu0 0.0
    %1020 = vmatpush2.msra.mxu0 0.0
    %1021 = vmatprep.subr.mxu0 0.0
    %1022 = vmatpush2.msra.mxu0 0.0
    %1023 = vmatprep.mubr.f32.mxu0 0.0
    %v1024 = vand.u32 %v684, 4294901760
    %v1025 = vsub.f32 %v684, %v1024
    %1026 = vmatmul.mubr.f32.gmra.mxu0 %v1025
    %v1027 = vpop.f32.mrf.mxu0
    %v1028 = vadd.f32 %v924, %v1027
    %v1029 = vpop.f32.mrf.mxu0
    %1030 = vdwg.mxu0
    %1031 = vmatprep.subr.mxu0 0.0
    %v1032 = vand.u32 %v40, 4294901760
    %1033 = vmatpush1.msra.mxu0 %v1032
    %1034 = vmatprep.subr.mxu0 0.0
    %v1035 = vand.u32 %v39, 4294901760
    %1036 = vmatpush1.msra.mxu0 %v1035
    %1037 = vmatprep.subr.mxu0 0.0
    %v1038 = vand.u32 %v38, 4294901760
    %1039 = vmatpush1.msra.mxu0 %v1038
    %1040 = vmatprep.subr.mxu0 0.0
    %v1041 = vand.u32 %v37, 4294901760
    %1042 = vmatpush1.msra.mxu0 %v1041
    %1043 = vmatprep.subr.mxu0 0.0
    %v1044 = vand.u32 %v36, 4294901760
    %1045 = vmatpush1.msra.mxu0 %v1044
    %1046 = vmatprep.subr.mxu0 0.0
    %v1047 = vand.u32 %v35, 4294901760
    %1048 = vmatpush1.msra.mxu0 %v1047
    %1049 = vmatprep.subr.mxu0 0.0
    %v1050 = vand.u32 %v34, 4294901760
    %1051 = vmatpush1.msra.mxu0 %v1050
    %1052 = vmatprep.subr.mxu0 0.0
    %v1053 = vand.u32 %v33, 4294901760
    %1054 = vmatpush1.msra.mxu0 %v1053
    %1055 = vmatprep.subr.mxu0 0.0
    %v1056 = vand.u32 %v32, 4294901760
    %1057 = vmatpush1.msra.mxu0 %v1056
    %1058 = vmatprep.subr.mxu0 0.0
    %v1059 = vand.u32 %v31, 4294901760
    %1060 = vmatpush1.msra.mxu0 %v1059
    %1061 = vmatprep.subr.mxu0 0.0
    %v1062 = vand.u32 %v30, 4294901760
    %1063 = vmatpush1.msra.mxu0 %v1062
    %1064 = vmatprep.subr.mxu0 0.0
    %v1065 = vand.u32 %v29, 4294901760
    %1066 = vmatpush1.msra.mxu0 %v1065
    %1067 = vmatprep.subr.mxu0 0.0
    %v1068 = vand.u32 %v28, 4294901760
    %1069 = vmatpush1.msra.mxu0 %v1068
    %1070 = vmatprep.subr.mxu0 0.0
    %v1071 = vand.u32 %v27, 4294901760
    %1072 = vmatpush1.msra.mxu0 %v1071
    %1073 = vmatprep.subr.mxu0 0.0
    %v1074 = vand.u32 %v26, 4294901760
    %1075 = vmatpush1.msra.mxu0 %v1074
    %1076 = vmatprep.subr.mxu0 0.0
    %v1077 = vand.u32 %v25, 4294901760
    %1078 = vmatpush1.msra.mxu0 %v1077
    %1079 = vmatprep.subr.mxu0 0.0
    %1080 = vmatpush2.msra.mxu0 0.0
    %1081 = vmatprep.subr.mxu0 0.0
    %1082 = vmatpush2.msra.mxu0 0.0
    %1083 = vmatprep.subr.mxu0 0.0
    %1084 = vmatpush2.msra.mxu0 0.0
    %1085 = vmatprep.subr.mxu0 0.0
    %1086 = vmatpush2.msra.mxu0 0.0
    %1087 = vmatprep.subr.mxu0 0.0
    %1088 = vmatpush2.msra.mxu0 0.0
    %1089 = vmatprep.subr.mxu0 0.0
    %1090 = vmatpush2.msra.mxu0 0.0
    %1091 = vmatprep.subr.mxu0 0.0
    %1092 = vmatpush2.msra.mxu0 0.0
    %1093 = vmatprep.subr.mxu0 0.0
    %1094 = vmatpush2.msra.mxu0 0.0
    %1095 = vmatprep.subr.mxu0 0.0
    %1096 = vmatpush2.msra.mxu0 0.0
    %1097 = vmatprep.subr.mxu0 0.0
    %1098 = vmatpush2.msra.mxu0 0.0
    %1099 = vmatprep.subr.mxu0 0.0
    %1100 = vmatpush2.msra.mxu0 0.0
    %1101 = vmatprep.subr.mxu0 0.0
    %1102 = vmatpush2.msra.mxu0 0.0
    %1103 = vmatprep.subr.mxu0 0.0
    %1104 = vmatpush2.msra.mxu0 0.0
    %1105 = vmatprep.subr.mxu0 0.0
    %1106 = vmatpush2.msra.mxu0 0.0
    %1107 = vmatprep.subr.mxu0 0.0
    %1108 = vmatpush2.msra.mxu0 0.0
    %1109 = vmatprep.subr.mxu0 0.0
    %1110 = vmatpush2.msra.mxu0 0.0
    %1111 = vmatprep.mubr.f32.mxu0 0.0
    %v1112 = vand.u32 %v684, 4294901760
    %v1113 = vsub.f32 %v684, %v1112
    %v1114 = vand.u32 %v1113, 4294901760
    %1115 = vmatmul.mubr.f32.gmra.mxu0 %v1114
    %v1116 = vpop.f32.mrf.mxu0
    %v1117 = vadd.f32 %v1028, %v1116
    %v1118 = vpop.f32.mrf.mxu0
    %1119 = vdwg.mxu0
    %1120 = vmatprep.subr.mxu0 0.0
    %v1121 = vand.u32 %v40, 4294901760
    %v1122 = vsub.f32 %v40, %v1121
    %v1123 = vand.u32 %v1122, 4294901760
    %1124 = vmatpush1.msra.mxu0 %v1123
    %1125 = vmatprep.subr.mxu0 0.0
    %v1126 = vand.u32 %v39, 4294901760
    %v1127 = vsub.f32 %v39, %v1126
    %v1128 = vand.u32 %v1127, 4294901760
    %1129 = vmatpush1.msra.mxu0 %v1128
    %1130 = vmatprep.subr.mxu0 0.0
    %v1131 = vand.u32 %v38, 4294901760
    %v1132 = vsub.f32 %v38, %v1131
    %v1133 = vand.u32 %v1132, 4294901760
    %1134 = vmatpush1.msra.mxu0 %v1133
    %1135 = vmatprep.subr.mxu0 0.0
    %v1136 = vand.u32 %v37, 4294901760
    %v1137 = vsub.f32 %v37, %v1136
    %v1138 = vand.u32 %v1137, 4294901760
    %1139 = vmatpush1.msra.mxu0 %v1138
    %1140 = vmatprep.subr.mxu0 0.0
    %v1141 = vand.u32 %v36, 4294901760
    %v1142 = vsub.f32 %v36, %v1141
    %v1143 = vand.u32 %v1142, 4294901760
    %1144 = vmatpush1.msra.mxu0 %v1143
    %1145 = vmatprep.subr.mxu0 0.0
    %v1146 = vand.u32 %v35, 4294901760
    %v1147 = vsub.f32 %v35, %v1146
    %v1148 = vand.u32 %v1147, 4294901760
    %1149 = vmatpush1.msra.mxu0 %v1148
    %1150 = vmatprep.subr.mxu0 0.0
    %v1151 = vand.u32 %v34, 4294901760
    %v1152 = vsub.f32 %v34, %v1151
    %v1153 = vand.u32 %v1152, 4294901760
    %1154 = vmatpush1.msra.mxu0 %v1153
    %1155 = vmatprep.subr.mxu0 0.0
    %v1156 = vand.u32 %v33, 4294901760
    %v1157 = vsub.f32 %v33, %v1156
    %v1158 = vand.u32 %v1157, 4294901760
    %1159 = vmatpush1.msra.mxu0 %v1158
    %1160 = vmatprep.subr.mxu0 0.0
    %v1161 = vand.u32 %v32, 4294901760
    %v1162 = vsub.f32 %v32, %v1161
    %v1163 = vand.u32 %v1162, 4294901760
    %1164 = vmatpush1.msra.mxu0 %v1163
    %1165 = vmatprep.subr.mxu0 0.0
    %v1166 = vand.u32 %v31, 4294901760
    %v1167 = vsub.f32 %v31, %v1166
    %v1168 = vand.u32 %v1167, 4294901760
    %1169 = vmatpush1.msra.mxu0 %v1168
    %1170 = vmatprep.subr.mxu0 0.0
    %v1171 = vand.u32 %v30, 4294901760
    %v1172 = vsub.f32 %v30, %v1171
    %v1173 = vand.u32 %v1172, 4294901760
    %1174 = vmatpush1.msra.mxu0 %v1173
    %1175 = vmatprep.subr.mxu0 0.0
    %v1176 = vand.u32 %v29, 4294901760
    %v1177 = vsub.f32 %v29, %v1176
    %v1178 = vand.u32 %v1177, 4294901760
    %1179 = vmatpush1.msra.mxu0 %v1178
    %1180 = vmatprep.subr.mxu0 0.0
    %v1181 = vand.u32 %v28, 4294901760
    %v1182 = vsub.f32 %v28, %v1181
    %v1183 = vand.u32 %v1182, 4294901760
    %1184 = vmatpush1.msra.mxu0 %v1183
    %1185 = vmatprep.subr.mxu0 0.0
    %v1186 = vand.u32 %v27, 4294901760
    %v1187 = vsub.f32 %v27, %v1186
    %v1188 = vand.u32 %v1187, 4294901760
    %1189 = vmatpush1.msra.mxu0 %v1188
    %1190 = vmatprep.subr.mxu0 0.0
    %v1191 = vand.u32 %v26, 4294901760
    %v1192 = vsub.f32 %v26, %v1191
    %v1193 = vand.u32 %v1192, 4294901760
    %1194 = vmatpush1.msra.mxu0 %v1193
    %1195 = vmatprep.subr.mxu0 0.0
    %v1196 = vand.u32 %v25, 4294901760
    %v1197 = vsub.f32 %v25, %v1196
    %v1198 = vand.u32 %v1197, 4294901760
    %1199 = vmatpush1.msra.mxu0 %v1198
    %1200 = vmatprep.subr.mxu0 0.0
    %1201 = vmatpush2.msra.mxu0 0.0
    %1202 = vmatprep.subr.mxu0 0.0
    %1203 = vmatpush2.msra.mxu0 0.0
    %1204 = vmatprep.subr.mxu0 0.0
    %1205 = vmatpush2.msra.mxu0 0.0
    %1206 = vmatprep.subr.mxu0 0.0
    %1207 = vmatpush2.msra.mxu0 0.0
    %1208 = vmatprep.subr.mxu0 0.0
    %1209 = vmatpush2.msra.mxu0 0.0
    %1210 = vmatprep.subr.mxu0 0.0
    %1211 = vmatpush2.msra.mxu0 0.0
    %1212 = vmatprep.subr.mxu0 0.0
    %1213 = vmatpush2.msra.mxu0 0.0
    %1214 = vmatprep.subr.mxu0 0.0
    %1215 = vmatpush2.msra.mxu0 0.0
    %1216 = vmatprep.subr.mxu0 0.0
    %1217 = vmatpush2.msra.mxu0 0.0
    %1218 = vmatprep.subr.mxu0 0.0
    %1219 = vmatpush2.msra.mxu0 0.0
    %1220 = vmatprep.subr.mxu0 0.0
    %1221 = vmatpush2.msra.mxu0 0.0
    %1222 = vmatprep.subr.mxu0 0.0
    %1223 = vmatpush2.msra.mxu0 0.0
    %1224 = vmatprep.subr.mxu0 0.0
    %1225 = vmatpush2.msra.mxu0 0.0
    %1226 = vmatprep.subr.mxu0 0.0
    %1227 = vmatpush2.msra.mxu0 0.0
    %1228 = vmatprep.subr.mxu0 0.0
    %1229 = vmatpush2.msra.mxu0 0.0
    %1230 = vmatprep.subr.mxu0 0.0
    %1231 = vmatpush2.msra.mxu0 0.0
    %1232 = vmatprep.mubr.f32.mxu0 0.0
    %v1233 = vand.u32 %v684, 4294901760
    %1234 = vmatmul.mubr.f32.gmra.mxu0 %v1233
    %v1235 = vpop.f32.mrf.mxu0
    %v1236 = vadd.f32 %v1117, %v1235
    %v1237 = vpop.f32.mrf.mxu0
    %1238 = vdwg.mxu0
    %1239 = vmatprep.subr.mxu0 0.0
    %v1240 = vand.u32 %v40, 4294901760
    %1241 = vmatpush1.msra.mxu0 %v1240
    %1242 = vmatprep.subr.mxu0 0.0
    %v1243 = vand.u32 %v39, 4294901760
    %1244 = vmatpush1.msra.mxu0 %v1243
    %1245 = vmatprep.subr.mxu0 0.0
    %v1246 = vand.u32 %v38, 4294901760
    %1247 = vmatpush1.msra.mxu0 %v1246
    %1248 = vmatprep.subr.mxu0 0.0
    %v1249 = vand.u32 %v37, 4294901760
    %1250 = vmatpush1.msra.mxu0 %v1249
    %1251 = vmatprep.subr.mxu0 0.0
    %v1252 = vand.u32 %v36, 4294901760
    %1253 = vmatpush1.msra.mxu0 %v1252
    %1254 = vmatprep.subr.mxu0 0.0
    %v1255 = vand.u32 %v35, 4294901760
    %1256 = vmatpush1.msra.mxu0 %v1255
    %1257 = vmatprep.subr.mxu0 0.0
    %v1258 = vand.u32 %v34, 4294901760
    %1259 = vmatpush1.msra.mxu0 %v1258
    %1260 = vmatprep.subr.mxu0 0.0
    %v1261 = vand.u32 %v33, 4294901760
    %1262 = vmatpush1.msra.mxu0 %v1261
    %1263 = vmatprep.subr.mxu0 0.0
    %v1264 = vand.u32 %v32, 4294901760
    %1265 = vmatpush1.msra.mxu0 %v1264
    %1266 = vmatprep.subr.mxu0 0.0
    %v1267 = vand.u32 %v31, 4294901760
    %1268 = vmatpush1.msra.mxu0 %v1267
    %1269 = vmatprep.subr.mxu0 0.0
    %v1270 = vand.u32 %v30, 4294901760
    %1271 = vmatpush1.msra.mxu0 %v1270
    %1272 = vmatprep.subr.mxu0 0.0
    %v1273 = vand.u32 %v29, 4294901760
    %1274 = vmatpush1.msra.mxu0 %v1273
    %1275 = vmatprep.subr.mxu0 0.0
    %v1276 = vand.u32 %v28, 4294901760
    %1277 = vmatpush1.msra.mxu0 %v1276
    %1278 = vmatprep.subr.mxu0 0.0
    %v1279 = vand.u32 %v27, 4294901760
    %1280 = vmatpush1.msra.mxu0 %v1279
    %1281 = vmatprep.subr.mxu0 0.0
    %v1282 = vand.u32 %v26, 4294901760
    %1283 = vmatpush1.msra.mxu0 %v1282
    %1284 = vmatprep.subr.mxu0 0.0
    %v1285 = vand.u32 %v25, 4294901760
    %1286 = vmatpush1.msra.mxu0 %v1285
    %1287 = vmatprep.subr.mxu0 0.0
    %1288 = vmatpush2.msra.mxu0 0.0
    %1289 = vmatprep.subr.mxu0 0.0
    %1290 = vmatpush2.msra.mxu0 0.0
    %1291 = vmatprep.subr.mxu0 0.0
    %1292 = vmatpush2.msra.mxu0 0.0
    %1293 = vmatprep.subr.mxu0 0.0
    %1294 = vmatpush2.msra.mxu0 0.0
    %1295 = vmatprep.subr.mxu0 0.0
    %1296 = vmatpush2.msra.mxu0 0.0
    %1297 = vmatprep.subr.mxu0 0.0
    %1298 = vmatpush2.msra.mxu0 0.0
    %1299 = vmatprep.subr.mxu0 0.0
    %1300 = vmatpush2.msra.mxu0 0.0
    %1301 = vmatprep.subr.mxu0 0.0
    %1302 = vmatpush2.msra.mxu0 0.0
    %1303 = vmatprep.subr.mxu0 0.0
    %1304 = vmatpush2.msra.mxu0 0.0
    %1305 = vmatprep.subr.mxu0 0.0
    %1306 = vmatpush2.msra.mxu0 0.0
    %1307 = vmatprep.subr.mxu0 0.0
    %1308 = vmatpush2.msra.mxu0 0.0
    %1309 = vmatprep.subr.mxu0 0.0
    %1310 = vmatpush2.msra.mxu0 0.0
    %1311 = vmatprep.subr.mxu0 0.0
    %1312 = vmatpush2.msra.mxu0 0.0
    %1313 = vmatprep.subr.mxu0 0.0
    %1314 = vmatpush2.msra.mxu0 0.0
    %1315 = vmatprep.subr.mxu0 0.0
    %1316 = vmatpush2.msra.mxu0 0.0
    %1317 = vmatprep.subr.mxu0 0.0
    %1318 = vmatpush2.msra.mxu0 0.0
    %1319 = vmatprep.mubr.f32.mxu0 0.0
    %v1320 = vand.u32 %v684, 4294901760
    %1321 = vmatmul.mubr.f32.gmra.mxu0 %v1320
    %v1322 = vpop.f32.mrf.mxu0
    %v1323 = vadd.f32 %v1236, %v1322
    %v1324 = vpop.f32.mrf.mxu0
    %1325 = vdwg.mxu0
    %v1326 = vrsqrt.pop %v1323
    %v1327 = vmul.f32 %v1323, %v1326
    %vm1328 = vcmp.eq.f32.partialorder %v1323, inf
    %v1329 = vsel %vm1328, %v1323, %v1327
    %vm1330 = vcmp.eq.f32.partialorder %v1323, 0.0
    %v1331 = vand.u32 %v1323, 2147483648
    %v1332 = vsel %vm1330, %v1331, %v1329
    %v1333 = vstv %s24
    %v1334 = vmul.f32 %v1333, %v1332
    %v1335 = vmax.f32 %v681, 1e-24
    %v1336 = vrsqrt.pop %v1335
    %v1337 = vmul.f32 %v1334, %v1336
    %vm1338 = vcmask 31744
    %v1340 = vsel %vm1338, %v1337, 0
    %vm1342 = vcmask 1043456
    %v1344 = vsel %vm1342, %v41, 0
    %1346 = vmatprep.subr.mxu0 0.0
    %1347 = vmatpush1.msra.mxu0 0.0
    %1348 = vmatprep.subr.mxu0 0.0
    %1349 = vmatpush1.msra.mxu0 0.0
    %1350 = vmatprep.subr.mxu0 0.0
    %1351 = vmatpush1.msra.mxu0 0.0
    %1352 = vmatprep.subr.mxu0 0.0
    %1353 = vmatpush1.msra.mxu0 0.0
    %1354 = vmatprep.subr.mxu0 0.0
    %1355 = vmatpush1.msra.mxu0 0.0
    %1356 = vmatprep.subr.mxu0 0.0
    %1357 = vmatpush1.msra.mxu0 0.0
    %1358 = vmatprep.subr.mxu0 0.0
    %1359 = vmatpush1.msra.mxu0 0.0
    %1360 = vmatprep.subr.mxu0 0.0
    %1361 = vmatpush1.msra.mxu0 0.0
    %1362 = vmatprep.subr.mxu0 0.0
    %1363 = vmatpush1.msra.mxu0 0.0
    %1364 = vmatprep.subr.mxu0 0.0
    %1365 = vmatpush1.msra.mxu0 0.0
    %1366 = vmatprep.subr.mxu0 0.0
    %1367 = vmatpush1.msra.mxu0 0.0
    %1368 = vmatprep.subr.mxu0 0.0
    %1369 = vmatpush1.msra.mxu0 0.0
    %1370 = vmatprep.subr.mxu0 0.0
    %1371 = vmatpush1.msra.mxu0 0.0
    %1372 = vmatprep.subr.mxu0 0.0
    %1373 = vmatpush1.msra.mxu0 0.0
    %1374 = vmatprep.subr.mxu0 0.0
    %1375 = vmatpush1.msra.mxu0 0.0
    %1376 = vmatprep.subr.mxu0 0.0
    %v1377 = vand.u32 %v1344, 4294901760
    %1378 = vmatpush1.msra.mxu0 %v1377
    %1379 = vmatprep.subr.mxu0 0.0
    %1380 = vmatpush2.msra.mxu0 0.0
    %1381 = vmatprep.subr.mxu0 0.0
    %1382 = vmatpush2.msra.mxu0 0.0
    %1383 = vmatprep.subr.mxu0 0.0
    %1384 = vmatpush2.msra.mxu0 0.0
    %1385 = vmatprep.subr.mxu0 0.0
    %1386 = vmatpush2.msra.mxu0 0.0
    %1387 = vmatprep.subr.mxu0 0.0
    %1388 = vmatpush2.msra.mxu0 0.0
    %1389 = vmatprep.subr.mxu0 0.0
    %1390 = vmatpush2.msra.mxu0 0.0
    %1391 = vmatprep.subr.mxu0 0.0
    %1392 = vmatpush2.msra.mxu0 0.0
    %1393 = vmatprep.subr.mxu0 0.0
    %1394 = vmatpush2.msra.mxu0 0.0
    %1395 = vmatprep.subr.mxu0 0.0
    %1396 = vmatpush2.msra.mxu0 0.0
    %1397 = vmatprep.subr.mxu0 0.0
    %1398 = vmatpush2.msra.mxu0 0.0
    %1399 = vmatprep.subr.mxu0 0.0
    %1400 = vmatpush2.msra.mxu0 0.0
    %1401 = vmatprep.subr.mxu0 0.0
    %1402 = vmatpush2.msra.mxu0 0.0
    %1403 = vmatprep.subr.mxu0 0.0
    %1404 = vmatpush2.msra.mxu0 0.0
    %1405 = vmatprep.subr.mxu0 0.0
    %1406 = vmatpush2.msra.mxu0 0.0
    %1407 = vmatprep.subr.mxu0 0.0
    %1408 = vmatpush2.msra.mxu0 0.0
    %1409 = vmatprep.subr.mxu0 0.0
    %1410 = vmatpush2.msra.mxu0 0.0
    %1411 = vmatprep.mubr.f32.mxu0 0.0
    %v1412 = vand.u32 %v1340, 4294901760
    %v1413 = vsub.f32 %v1340, %v1412
    %v1414 = vand.u32 %v1413, 4294901760
    %v1415 = vsub.f32 %v1413, %v1414
    %v1416 = vand.u32 %v1415, 4294901760
    %1417 = vmatmul.mubr.f32.gmra.mxu0 %v1416
    %v1418 = vpop.f32.mrf.mxu0
    %v1419 = vadd.f32 0.0, %v1418
    %v1420 = vpop.f32.mrf.mxu0
    %1421 = vdwg.mxu0
    %1422 = vmatprep.subr.mxu0 0.0
    %1423 = vmatpush1.msra.mxu0 0.0
    %1424 = vmatprep.subr.mxu0 0.0
    %1425 = vmatpush1.msra.mxu0 0.0
    %1426 = vmatprep.subr.mxu0 0.0
    %1427 = vmatpush1.msra.mxu0 0.0
    %1428 = vmatprep.subr.mxu0 0.0
    %1429 = vmatpush1.msra.mxu0 0.0
    %1430 = vmatprep.subr.mxu0 0.0
    %1431 = vmatpush1.msra.mxu0 0.0
    %1432 = vmatprep.subr.mxu0 0.0
    %1433 = vmatpush1.msra.mxu0 0.0
    %1434 = vmatprep.subr.mxu0 0.0
    %1435 = vmatpush1.msra.mxu0 0.0
    %1436 = vmatprep.subr.mxu0 0.0
    %1437 = vmatpush1.msra.mxu0 0.0
    %1438 = vmatprep.subr.mxu0 0.0
    %1439 = vmatpush1.msra.mxu0 0.0
    %1440 = vmatprep.subr.mxu0 0.0
    %1441 = vmatpush1.msra.mxu0 0.0
    %1442 = vmatprep.subr.mxu0 0.0
    %1443 = vmatpush1.msra.mxu0 0.0
    %1444 = vmatprep.subr.mxu0 0.0
    %1445 = vmatpush1.msra.mxu0 0.0
    %1446 = vmatprep.subr.mxu0 0.0
    %1447 = vmatpush1.msra.mxu0 0.0
    %1448 = vmatprep.subr.mxu0 0.0
    %1449 = vmatpush1.msra.mxu0 0.0
    %1450 = vmatprep.subr.mxu0 0.0
    %1451 = vmatpush1.msra.mxu0 0.0
    %1452 = vmatprep.subr.mxu0 0.0
    %v1453 = vand.u32 %v1344, 4294901760
    %v1454 = vsub.f32 %v1344, %v1453
    %v1455 = vand.u32 %v1454, 4294901760
    %v1456 = vsub.f32 %v1454, %v1455
    %v1457 = vand.u32 %v1456, 4294901760
    %1458 = vmatpush1.msra.mxu0 %v1457
    %1459 = vmatprep.subr.mxu0 0.0
    %1460 = vmatpush2.msra.mxu0 0.0
    %1461 = vmatprep.subr.mxu0 0.0
    %1462 = vmatpush2.msra.mxu0 0.0
    %1463 = vmatprep.subr.mxu0 0.0
    %1464 = vmatpush2.msra.mxu0 0.0
    %1465 = vmatprep.subr.mxu0 0.0
    %1466 = vmatpush2.msra.mxu0 0.0
    %1467 = vmatprep.subr.mxu0 0.0
    %1468 = vmatpush2.msra.mxu0 0.0
    %1469 = vmatprep.subr.mxu0 0.0
    %1470 = vmatpush2.msra.mxu0 0.0
    %1471 = vmatprep.subr.mxu0 0.0
    %1472 = vmatpush2.msra.mxu0 0.0
    %1473 = vmatprep.subr.mxu0 0.0
    %1474 = vmatpush2.msra.mxu0 0.0
    %1475 = vmatprep.subr.mxu0 0.0
    %1476 = vmatpush2.msra.mxu0 0.0
    %1477 = vmatprep.subr.mxu0 0.0
    %1478 = vmatpush2.msra.mxu0 0.0
    %1479 = vmatprep.subr.mxu0 0.0
    %1480 = vmatpush2.msra.mxu0 0.0
    %1481 = vmatprep.subr.mxu0 0.0
    %1482 = vmatpush2.msra.mxu0 0.0
    %1483 = vmatprep.subr.mxu0 0.0
    %1484 = vmatpush2.msra.mxu0 0.0
    %1485 = vmatprep.subr.mxu0 0.0
    %1486 = vmatpush2.msra.mxu0 0.0
    %1487 = vmatprep.subr.mxu0 0.0
    %1488 = vmatpush2.msra.mxu0 0.0
    %1489 = vmatprep.subr.mxu0 0.0
    %1490 = vmatpush2.msra.mxu0 0.0
    %1491 = vmatprep.mubr.f32.mxu0 0.0
    %v1492 = vand.u32 %v1340, 4294901760
    %1493 = vmatmul.mubr.f32.gmra.mxu0 %v1492
    %v1494 = vpop.f32.mrf.mxu0
    %v1495 = vadd.f32 %v1419, %v1494
    %v1496 = vpop.f32.mrf.mxu0
    %1497 = vdwg.mxu0
    %1498 = vmatprep.subr.mxu0 0.0
    %1499 = vmatpush1.msra.mxu0 0.0
    %1500 = vmatprep.subr.mxu0 0.0
    %1501 = vmatpush1.msra.mxu0 0.0
    %1502 = vmatprep.subr.mxu0 0.0
    %1503 = vmatpush1.msra.mxu0 0.0
    %1504 = vmatprep.subr.mxu0 0.0
    %1505 = vmatpush1.msra.mxu0 0.0
    %1506 = vmatprep.subr.mxu0 0.0
    %1507 = vmatpush1.msra.mxu0 0.0
    %1508 = vmatprep.subr.mxu0 0.0
    %1509 = vmatpush1.msra.mxu0 0.0
    %1510 = vmatprep.subr.mxu0 0.0
    %1511 = vmatpush1.msra.mxu0 0.0
    %1512 = vmatprep.subr.mxu0 0.0
    %1513 = vmatpush1.msra.mxu0 0.0
    %1514 = vmatprep.subr.mxu0 0.0
    %1515 = vmatpush1.msra.mxu0 0.0
    %1516 = vmatprep.subr.mxu0 0.0
    %1517 = vmatpush1.msra.mxu0 0.0
    %1518 = vmatprep.subr.mxu0 0.0
    %1519 = vmatpush1.msra.mxu0 0.0
    %1520 = vmatprep.subr.mxu0 0.0
    %1521 = vmatpush1.msra.mxu0 0.0
    %1522 = vmatprep.subr.mxu0 0.0
    %1523 = vmatpush1.msra.mxu0 0.0
    %1524 = vmatprep.subr.mxu0 0.0
    %1525 = vmatpush1.msra.mxu0 0.0
    %1526 = vmatprep.subr.mxu0 0.0
    %1527 = vmatpush1.msra.mxu0 0.0
    %1528 = vmatprep.subr.mxu0 0.0
    %v1529 = vand.u32 %v1344, 4294901760
    %v1530 = vsub.f32 %v1344, %v1529
    %1531 = vmatpush1.msra.mxu0 %v1530
    %1532 = vmatprep.subr.mxu0 0.0
    %1533 = vmatpush2.msra.mxu0 0.0
    %1534 = vmatprep.subr.mxu0 0.0
    %1535 = vmatpush2.msra.mxu0 0.0
    %1536 = vmatprep.subr.mxu0 0.0
    %1537 = vmatpush2.msra.mxu0 0.0
    %1538 = vmatprep.subr.mxu0 0.0
    %1539 = vmatpush2.msra.mxu0 0.0
    %1540 = vmatprep.subr.mxu0 0.0
    %1541 = vmatpush2.msra.mxu0 0.0
    %1542 = vmatprep.subr.mxu0 0.0
    %1543 = vmatpush2.msra.mxu0 0.0
    %1544 = vmatprep.subr.mxu0 0.0
    %1545 = vmatpush2.msra.mxu0 0.0
    %1546 = vmatprep.subr.mxu0 0.0
    %1547 = vmatpush2.msra.mxu0 0.0
    %1548 = vmatprep.subr.mxu0 0.0
    %1549 = vmatpush2.msra.mxu0 0.0
    %1550 = vmatprep.subr.mxu0 0.0
    %1551 = vmatpush2.msra.mxu0 0.0
    %1552 = vmatprep.subr.mxu0 0.0
    %1553 = vmatpush2.msra.mxu0 0.0
    %1554 = vmatprep.subr.mxu0 0.0
    %1555 = vmatpush2.msra.mxu0 0.0
    %1556 = vmatprep.subr.mxu0 0.0
    %1557 = vmatpush2.msra.mxu0 0.0
    %1558 = vmatprep.subr.mxu0 0.0
    %1559 = vmatpush2.msra.mxu0 0.0
    %1560 = vmatprep.subr.mxu0 0.0
    %1561 = vmatpush2.msra.mxu0 0.0
    %1562 = vmatprep.subr.mxu0 0.0
    %1563 = vmatpush2.msra.mxu0 0.0
    %1564 = vmatprep.mubr.f32.mxu0 0.0
    %v1565 = vand.u32 %v1340, 4294901760
    %v1566 = vsub.f32 %v1340, %v1565
    %1567 = vmatmul.mubr.f32.gmra.mxu0 %v1566
    %v1568 = vpop.f32.mrf.mxu0
    %v1569 = vadd.f32 %v1495, %v1568
    %v1570 = vpop.f32.mrf.mxu0
    %1571 = vdwg.mxu0
    %1572 = vmatprep.subr.mxu0 0.0
    %1573 = vmatpush1.msra.mxu0 0.0
    %1574 = vmatprep.subr.mxu0 0.0
    %1575 = vmatpush1.msra.mxu0 0.0
    %1576 = vmatprep.subr.mxu0 0.0
    %1577 = vmatpush1.msra.mxu0 0.0
    %1578 = vmatprep.subr.mxu0 0.0
    %1579 = vmatpush1.msra.mxu0 0.0
    %1580 = vmatprep.subr.mxu0 0.0
    %1581 = vmatpush1.msra.mxu0 0.0
    %1582 = vmatprep.subr.mxu0 0.0
    %1583 = vmatpush1.msra.mxu0 0.0
    %1584 = vmatprep.subr.mxu0 0.0
    %1585 = vmatpush1.msra.mxu0 0.0
    %1586 = vmatprep.subr.mxu0 0.0
    %1587 = vmatpush1.msra.mxu0 0.0
    %1588 = vmatprep.subr.mxu0 0.0
    %1589 = vmatpush1.msra.mxu0 0.0
    %1590 = vmatprep.subr.mxu0 0.0
    %1591 = vmatpush1.msra.mxu0 0.0
    %1592 = vmatprep.subr.mxu0 0.0
    %1593 = vmatpush1.msra.mxu0 0.0
    %1594 = vmatprep.subr.mxu0 0.0
    %1595 = vmatpush1.msra.mxu0 0.0
    %1596 = vmatprep.subr.mxu0 0.0
    %1597 = vmatpush1.msra.mxu0 0.0
    %1598 = vmatprep.subr.mxu0 0.0
    %1599 = vmatpush1.msra.mxu0 0.0
    %1600 = vmatprep.subr.mxu0 0.0
    %1601 = vmatpush1.msra.mxu0 0.0
    %1602 = vmatprep.subr.mxu0 0.0
    %v1603 = vand.u32 %v1344, 4294901760
    %1604 = vmatpush1.msra.mxu0 %v1603
    %1605 = vmatprep.subr.mxu0 0.0
    %1606 = vmatpush2.msra.mxu0 0.0
    %1607 = vmatprep.subr.mxu0 0.0
    %1608 = vmatpush2.msra.mxu0 0.0
    %1609 = vmatprep.subr.mxu0 0.0
    %1610 = vmatpush2.msra.mxu0 0.0
    %1611 = vmatprep.subr.mxu0 0.0
    %1612 = vmatpush2.msra.mxu0 0.0
    %1613 = vmatprep.subr.mxu0 0.0
    %1614 = vmatpush2.msra.mxu0 0.0
    %1615 = vmatprep.subr.mxu0 0.0
    %1616 = vmatpush2.msra.mxu0 0.0
    %1617 = vmatprep.subr.mxu0 0.0
    %1618 = vmatpush2.msra.mxu0 0.0
    %1619 = vmatprep.subr.mxu0 0.0
    %1620 = vmatpush2.msra.mxu0 0.0
    %1621 = vmatprep.subr.mxu0 0.0
    %1622 = vmatpush2.msra.mxu0 0.0
    %1623 = vmatprep.subr.mxu0 0.0
    %1624 = vmatpush2.msra.mxu0 0.0
    %1625 = vmatprep.subr.mxu0 0.0
    %1626 = vmatpush2.msra.mxu0 0.0
    %1627 = vmatprep.subr.mxu0 0.0
    %1628 = vmatpush2.msra.mxu0 0.0
    %1629 = vmatprep.subr.mxu0 0.0
    %1630 = vmatpush2.msra.mxu0 0.0
    %1631 = vmatprep.subr.mxu0 0.0
    %1632 = vmatpush2.msra.mxu0 0.0
    %1633 = vmatprep.subr.mxu0 0.0
    %1634 = vmatpush2.msra.mxu0 0.0
    %1635 = vmatprep.subr.mxu0 0.0
    %1636 = vmatpush2.msra.mxu0 0.0
    %1637 = vmatprep.mubr.f32.mxu0 0.0
    %v1638 = vand.u32 %v1340, 4294901760
    %v1639 = vsub.f32 %v1340, %v1638
    %v1640 = vand.u32 %v1639, 4294901760
    %1641 = vmatmul.mubr.f32.gmra.mxu0 %v1640
    %v1642 = vpop.f32.mrf.mxu0
    %v1643 = vadd.f32 %v1569, %v1642
    %v1644 = vpop.f32.mrf.mxu0
    %1645 = vdwg.mxu0
    %1646 = vmatprep.subr.mxu0 0.0
    %1647 = vmatpush1.msra.mxu0 0.0
    %1648 = vmatprep.subr.mxu0 0.0
    %1649 = vmatpush1.msra.mxu0 0.0
    %1650 = vmatprep.subr.mxu0 0.0
    %1651 = vmatpush1.msra.mxu0 0.0
    %1652 = vmatprep.subr.mxu0 0.0
    %1653 = vmatpush1.msra.mxu0 0.0
    %1654 = vmatprep.subr.mxu0 0.0
    %1655 = vmatpush1.msra.mxu0 0.0
    %1656 = vmatprep.subr.mxu0 0.0
    %1657 = vmatpush1.msra.mxu0 0.0
    %1658 = vmatprep.subr.mxu0 0.0
    %1659 = vmatpush1.msra.mxu0 0.0
    %1660 = vmatprep.subr.mxu0 0.0
    %1661 = vmatpush1.msra.mxu0 0.0
    %1662 = vmatprep.subr.mxu0 0.0
    %1663 = vmatpush1.msra.mxu0 0.0
    %1664 = vmatprep.subr.mxu0 0.0
    %1665 = vmatpush1.msra.mxu0 0.0
    %1666 = vmatprep.subr.mxu0 0.0
    %1667 = vmatpush1.msra.mxu0 0.0
    %1668 = vmatprep.subr.mxu0 0.0
    %1669 = vmatpush1.msra.mxu0 0.0
    %1670 = vmatprep.subr.mxu0 0.0
    %1671 = vmatpush1.msra.mxu0 0.0
    %1672 = vmatprep.subr.mxu0 0.0
    %1673 = vmatpush1.msra.mxu0 0.0
    %1674 = vmatprep.subr.mxu0 0.0
    %1675 = vmatpush1.msra.mxu0 0.0
    %1676 = vmatprep.subr.mxu0 0.0
    %v1677 = vand.u32 %v1344, 4294901760
    %v1678 = vsub.f32 %v1344, %v1677
    %v1679 = vand.u32 %v1678, 4294901760
    %1680 = vmatpush1.msra.mxu0 %v1679
    %1681 = vmatprep.subr.mxu0 0.0
    %1682 = vmatpush2.msra.mxu0 0.0
    %1683 = vmatprep.subr.mxu0 0.0
    %1684 = vmatpush2.msra.mxu0 0.0
    %1685 = vmatprep.subr.mxu0 0.0
    %1686 = vmatpush2.msra.mxu0 0.0
    %1687 = vmatprep.subr.mxu0 0.0
    %1688 = vmatpush2.msra.mxu0 0.0
    %1689 = vmatprep.subr.mxu0 0.0
    %1690 = vmatpush2.msra.mxu0 0.0
    %1691 = vmatprep.subr.mxu0 0.0
    %1692 = vmatpush2.msra.mxu0 0.0
    %1693 = vmatprep.subr.mxu0 0.0
    %1694 = vmatpush2.msra.mxu0 0.0
    %1695 = vmatprep.subr.mxu0 0.0
    %1696 = vmatpush2.msra.mxu0 0.0
    %1697 = vmatprep.subr.mxu0 0.0
    %1698 = vmatpush2.msra.mxu0 0.0
    %1699 = vmatprep.subr.mxu0 0.0
    %1700 = vmatpush2.msra.mxu0 0.0
    %1701 = vmatprep.subr.mxu0 0.0
    %1702 = vmatpush2.msra.mxu0 0.0
    %1703 = vmatprep.subr.mxu0 0.0
    %1704 = vmatpush2.msra.mxu0 0.0
    %1705 = vmatprep.subr.mxu0 0.0
    %1706 = vmatpush2.msra.mxu0 0.0
    %1707 = vmatprep.subr.mxu0 0.0
    %1708 = vmatpush2.msra.mxu0 0.0
    %1709 = vmatprep.subr.mxu0 0.0
    %1710 = vmatpush2.msra.mxu0 0.0
    %1711 = vmatprep.subr.mxu0 0.0
    %1712 = vmatpush2.msra.mxu0 0.0
    %1713 = vmatprep.mubr.f32.mxu0 0.0
    %v1714 = vand.u32 %v1340, 4294901760
    %1715 = vmatmul.mubr.f32.gmra.mxu0 %v1714
    %v1716 = vpop.f32.mrf.mxu0
    %v1717 = vadd.f32 %v1643, %v1716
    %v1718 = vpop.f32.mrf.mxu0
    %1719 = vdwg.mxu0
    %1720 = vmatprep.subr.mxu0 0.0
    %1721 = vmatpush1.msra.mxu0 0.0
    %1722 = vmatprep.subr.mxu0 0.0
    %1723 = vmatpush1.msra.mxu0 0.0
    %1724 = vmatprep.subr.mxu0 0.0
    %1725 = vmatpush1.msra.mxu0 0.0
    %1726 = vmatprep.subr.mxu0 0.0
    %1727 = vmatpush1.msra.mxu0 0.0
    %1728 = vmatprep.subr.mxu0 0.0
    %1729 = vmatpush1.msra.mxu0 0.0
    %1730 = vmatprep.subr.mxu0 0.0
    %1731 = vmatpush1.msra.mxu0 0.0
    %1732 = vmatprep.subr.mxu0 0.0
    %1733 = vmatpush1.msra.mxu0 0.0
    %1734 = vmatprep.subr.mxu0 0.0
    %1735 = vmatpush1.msra.mxu0 0.0
    %1736 = vmatprep.subr.mxu0 0.0
    %1737 = vmatpush1.msra.mxu0 0.0
    %1738 = vmatprep.subr.mxu0 0.0
    %1739 = vmatpush1.msra.mxu0 0.0
    %1740 = vmatprep.subr.mxu0 0.0
    %1741 = vmatpush1.msra.mxu0 0.0
    %1742 = vmatprep.subr.mxu0 0.0
    %1743 = vmatpush1.msra.mxu0 0.0
    %1744 = vmatprep.subr.mxu0 0.0
    %1745 = vmatpush1.msra.mxu0 0.0
    %1746 = vmatprep.subr.mxu0 0.0
    %1747 = vmatpush1.msra.mxu0 0.0
    %1748 = vmatprep.subr.mxu0 0.0
    %1749 = vmatpush1.msra.mxu0 0.0
    %1750 = vmatprep.subr.mxu0 0.0
    %v1751 = vand.u32 %v1344, 4294901760
    %1752 = vmatpush1.msra.mxu0 %v1751
    %1753 = vmatprep.subr.mxu0 0.0
    %1754 = vmatpush2.msra.mxu0 0.0
    %1755 = vmatprep.subr.mxu0 0.0
    %1756 = vmatpush2.msra.mxu0 0.0
    %1757 = vmatprep.subr.mxu0 0.0
    %1758 = vmatpush2.msra.mxu0 0.0
    %1759 = vmatprep.subr.mxu0 0.0
    %1760 = vmatpush2.msra.mxu0 0.0
    %1761 = vmatprep.subr.mxu0 0.0
    %1762 = vmatpush2.msra.mxu0 0.0
    %1763 = vmatprep.subr.mxu0 0.0
    %1764 = vmatpush2.msra.mxu0 0.0
    %1765 = vmatprep.subr.mxu0 0.0
    %1766 = vmatpush2.msra.mxu0 0.0
    %1767 = vmatprep.subr.mxu0 0.0
    %1768 = vmatpush2.msra.mxu0 0.0
    %1769 = vmatprep.subr.mxu0 0.0
    %1770 = vmatpush2.msra.mxu0 0.0
    %1771 = vmatprep.subr.mxu0 0.0
    %1772 = vmatpush2.msra.mxu0 0.0
    %1773 = vmatprep.subr.mxu0 0.0
    %1774 = vmatpush2.msra.mxu0 0.0
    %1775 = vmatprep.subr.mxu0 0.0
    %1776 = vmatpush2.msra.mxu0 0.0
    %1777 = vmatprep.subr.mxu0 0.0
    %1778 = vmatpush2.msra.mxu0 0.0
    %1779 = vmatprep.subr.mxu0 0.0
    %1780 = vmatpush2.msra.mxu0 0.0
    %1781 = vmatprep.subr.mxu0 0.0
    %1782 = vmatpush2.msra.mxu0 0.0
    %1783 = vmatprep.subr.mxu0 0.0
    %1784 = vmatpush2.msra.mxu0 0.0
    %1785 = vmatprep.mubr.f32.mxu0 0.0
    %v1786 = vand.u32 %v1340, 4294901760
    %1787 = vmatmul.mubr.f32.gmra.mxu0 %v1786
    %v1788 = vpop.f32.mrf.mxu0
    %v1789 = vadd.f32 %v1717, %v1788
    %v1790 = vpop.f32.mrf.mxu0
    %1791 = vdwg.mxu0
    %v1792 = vmul.f32 %v23, %v1789
    %1793 = vst [vmem:[#allocation3] sm:$0xf] %v1792
    // Predicated region
    $region22: #{tpu_custom_call.1} parent=1 // pred_check
      _
    $region23: #{tpu_custom_call.1} parent=1 // pred_check_branch
      %1795 = sbr.rel (0) target = $region25
    $region24: #{tpu_custom_call.1} parent=1 // pred_region
      %s1797 = ssub.s32 64, 64
      %1798 = vsyncadd [#allocation4], %s1797
      %s1800 = sshll.u32 [#allocation3], 4
      %s1801 = int_to_ptr.vmem [resolvable:$true] %s1800
      %1803 = dma.vmem_to_hbm [thread:$0]  %s1801, 64, %s5, [#allocation4]
    $region25: #{tpu_custom_call.1} parent=1 // pred_fallthru
      _
    // Predicated region
    $region26: #{tpu_custom_call.1} parent=1 // pred_check
      _
    $region27: #{tpu_custom_call.1} parent=1 // pred_check_branch
      %1805 = sbr.rel (0) target = $region29
    $region28: #{tpu_custom_call.1} parent=1 // pred_region
      %1806 = dma.done [#allocation4], 64
    $region29: #{tpu_custom_call.1} parent=1 // pred_fallthru
      _
    %1807 = vsyncpa [#allocation4], 1

</llo_original>
